<compile_context>
chip_gen: v7x
topology: tpu7x:2x2x1
jax: 0.10.0
libtpu: 0.0.40
codegen_flags: <defaults>
</compile_context>

<pallas_src>
import functools

import jax
import jax.numpy as jnp
from jax.experimental import pallas as pl
from jax.experimental.pallas import tpu as pltpu

KSIZE = 7
PAD = (KSIZE - 1) // 2  # 3


# ----------------------------------------------------------------------------
# Small sizing helpers.
# ----------------------------------------------------------------------------
def _round_up(n, m):
    return ((n + m - 1) // m) * m


def _tile_bytes(rows, cols, itemsize):
    """VMEM footprint of one (rows, cols) buffer after (8, 128) tile padding."""
    return _round_up(max(rows, 1), 8) * _round_up(max(cols, 1), 128) * itemsize


def _vmem_capacity_bytes():
    try:
        cap = int(getattr(pltpu.get_tpu_info(), "vmem_capacity_bytes", 0))
        if cap > 0:
            return cap
    except Exception:
        pass
    return 64 << 20  # conservative default (v7x per-core VMEM)


def _pick_channel_tile(C, HW, itemsize, budget_bytes, bufs):
    """Largest multiple-of-8 channel tile whose per-step footprint fits budget.

    Never silently returns an unbounded tile: clamps to [8, C] and is paired
    with a cdiv grid, so non-divisor tiles are fine (tails masked / dropped).
    """
    if C <= 8:
        return C
    per_ch = max(1, bufs * HW * itemsize)
    t = (budget_bytes // per_ch) // 8 * 8
    return int(max(8, min(t, C)))


def _pad_layout(H, W):
    """Flat, row-zero-padded pooled-map layout: (lead, total_length)."""
    HW = H * W
    lead = _round_up(PAD * W + PAD, 128)       # lane-aligned interior start
    lpad = lead + HW + PAD * W + PAD           # room for the bottom halo reads
    return lead, lpad


# ----------------------------------------------------------------------------
# Shared conv + BN + sigmoid core (flat H*W domain, no per-row scatter).
# ----------------------------------------------------------------------------
def _conv_bn_sigmoid(mx, mn, w_ref, bn_ref, mask_ref, pad_ref, H, W):
    """7x7 conv (2->1, zero pad 3) + BN affine + sigmoid.

    mx, mn  : (1, H*W) f32 pooled maps (lane-dense)
    w_ref   : (98,) f32 SMEM, flattened OIHW conv weight
    bn_ref  : (2,)  f32 SMEM -> [bn_scale, bn_shift]
    mask_ref: (7, H*W) f32 VMEM column-validity masks (one per dj tap)
    pad_ref : (2, lpad) f32 VMEM scratch (row-zero-padded flat maps)
    Returns the (1, H*W) f32 sigmoid gate.
    """
    HW = H * W
    lead, lpad = _pad_layout(H, W)

    # Zero only the top/bottom halo strips; the interior is fully overwritten.
    pad_ref[:, 0:lead] = jnp.zeros((2, lead), jnp.float32)
    pad_ref[:, lead + HW:lpad] = jnp.zeros((2, lpad - lead - HW), jnp.float32)
    # Two dense, lane-aligned stores (no per-row scatter).
    pad_ref[0:1, lead:lead + HW] = mx
    pad_ref[1:2, lead:lead + HW] = mn

    # 98 taps as static lane-offset slice reads; 7 independent accumulators
    # (one per dj) expose ILP instead of a single 98-long dependence chain.
    base_off = lead - (PAD * W + PAD)
    accs = [jnp.zeros((1, HW), jnp.float32) for _ in range(KSIZE)]
    for c in range(2):
        wbase = c * KSIZE * KSIZE
        for di in range(KSIZE):
            for dj in range(KSIZE):
                wval = w_ref[wbase + di * KSIZE + dj]
                off = base_off + di * W + dj
                accs[dj] = accs[dj] + wval * pad_ref[c:c + 1, off:off + HW]

    # Column-validity masks kill the row-wrap contamination at left/right edges.
    conv = accs[0] * mask_ref[0:1, :]
    for dj in range(1, KSIZE):
        conv = conv + accs[dj] * mask_ref[dj:dj + 1, :]
    return jax.nn.sigmoid(conv * bn_ref[0] + bn_ref[1])


# ----------------------------------------------------------------------------
# Kernels.
# ----------------------------------------------------------------------------
def _fused_kernel(x_ref, w_ref, bn_ref, mask_ref, o_ref, pad_ref, *, C, H, W):
    """Channel pool + conv + BN + sigmoid + gating, fused per batch element.

    x_ref: (1, C, H*W) lane-dense block     o_ref: (1, C, H*W)
    """
    xv = x_ref[0]                                                 # (C, HW)
    mx = jnp.max(xv, axis=0, keepdims=True).astype(jnp.float32)
    mn = jnp.sum(xv, axis=0, keepdims=True, dtype=jnp.float32) * (1.0 / C)
    scale = _conv_bn_sigmoid(mx, mn, w_ref, bn_ref, mask_ref, pad_ref, H, W)
    o_ref[0] = (xv * scale.astype(xv.dtype)).astype(o_ref.dtype)


def _pool_scale_kernel(x_ref, w_ref, bn_ref, mask_ref, s_ref,
                       mx_ref, sm_ref, pad_ref, *, C, H, W, tcr):
    """Channel-tiled pool reduction; conv+BN+sigmoid only on the last step.

    Grid: (B, cdiv(C, tcr)) with the channel axis 'arbitrary' (reduction).
    x_ref: (1, tcr, H*W)    s_ref: (1, 1, H*W) f32 lane-dense gate output
    mx_ref/sm_ref: (1, H*W) f32 running max / sum scratch.
    """
    c_step = pl.program_id(1)
    xf = x_ref[0].astype(jnp.float32)                             # (tcr, HW)

    # Mask tail channels of the last (possibly partial) block.
    ch = jax.lax.broadcasted_iota(jnp.int32, (xf.shape[0], 1), 0) + c_step * tcr
    valid = ch < C
    blk_max = jnp.max(jnp.where(valid, xf, -jnp.inf), axis=0, keepdims=True)
    blk_sum = jnp.sum(jnp.where(valid, xf, 0.0), axis=0, keepdims=True)

    @pl.when(c_step == 0)
    def _():
        mx_ref[...] = blk_max
        sm_ref[...] = blk_sum

    @pl.when(c_step > 0)
    def _():
        mx_ref[...] = jnp.maximum(mx_ref[...], blk_max)
        sm_ref[...] = sm_ref[...] + blk_sum

    @pl.when(c_step == pl.num_programs(1) - 1)
    def _():
        mn = sm_ref[...] * (1.0 / C)
        s_ref[0] = _conv_bn_sigmoid(mx_ref[...], mn, w_ref, bn_ref, mask_ref,
                                    pad_ref, H, W)


def _gate_kernel(x_ref, s_ref, o_ref):
    """out = x * scale; lane-dense, memory-bound elementwise pass."""
    o_ref[...] = (x_ref[...] * s_ref[...]).astype(o_ref.dtype)


# ----------------------------------------------------------------------------
# Wrapper.
# ----------------------------------------------------------------------------
def spatial_gate(x, conv_w, bn_scale, bn_shift, *,
                 force_two_pass=False, tile_budget_bytes=None):
    """x: (B, C, H, W); conv_w: (1, 2, 7, 7); bn_*: scalars. Returns (B, C, H, W)."""
    B, C, H, W = x.shape
    HW = H * W
    isz = x.dtype.itemsize
    _, lpad = _pad_layout(H, W)

    w_flat = conv_w.reshape(-1).astype(jnp.float32)                    # (98,)
    bn = jnp.stack([jnp.asarray(bn_scale, jnp.float32),
                    jnp.asarray(bn_shift, jnp.float32)])               # (2,)
    # Column-validity masks (one per dj tap) for the flat-domain conv.
    w_idx = jnp.arange(HW, dtype=jnp.int32) % W
    masks = jnp.stack(
        [((w_idx + dj - PAD >= 0) & (w_idx + dj - PAD < W)).astype(jnp.float32)
         for dj in range(KSIZE)], axis=0)                              # (7, HW)

    x_flat = x.reshape(B, C, HW)                  # free reshape of NCHW in HBM

    vmem_cap = _vmem_capacity_bytes()
    fused_budget = max(min(vmem_cap // 2 - (8 << 20), 48 << 20), 8 << 20)
    gate_budget = (tile_budget_bytes if tile_budget_bytes is not None
                   else min(vmem_cap // 4, 32 << 20))

    mask_bytes = 2 * _tile_bytes(KSIZE, HW, 4)
    pad_bytes = _tile_bytes(2, lpad, 4)
    smem_specs = [pl.BlockSpec(memory_space=pltpu.MemorySpace.SMEM),
                  pl.BlockSpec(memory_space=pltpu.MemorySpace.SMEM)]

    fused_bytes = 4 * _tile_bytes(C, HW, isz) + mask_bytes + pad_bytes
    if not force_two_pass and fused_bytes <= fused_budget:
        # ---- Fused single pass: pool + conv + BN + sigmoid + gate.
        out_flat = pl.pallas_call(
            functools.partial(_fused_kernel, C=C, H=H, W=W),
            out_shape=jax.ShapeDtypeStruct((B, C, HW), x.dtype),
            grid=(B,),
            in_specs=[pl.BlockSpec((1, C, HW), lambda b: (b, 0, 0))]
                     + smem_specs
                     + [pl.BlockSpec((KSIZE, HW), lambda b: (0, 0))],
            out_specs=pl.BlockSpec((1, C, HW), lambda b: (b, 0, 0)),
            scratch_shapes=[pltpu.VMEM((2, lpad), jnp.float32)],
            compiler_params=pltpu.CompilerParams(
                dimension_semantics=("parallel",),
                vmem_limit_bytes=int(fused_bytes * 1.5) + (4 << 20)),
        )(x_flat, w_flat, bn, masks)
        return out_flat.reshape(B, C, H, W)

    # ---- Fallback for huge C*HW: two passes, both channel-tiled.
    # Pass 1: channel-tiled pool reduction -> lane-dense gate (B, 1, HW).
    tcr = _pick_channel_tile(C, HW, isz, gate_budget, bufs=2)
    n_cr = pl.cdiv(C, tcr)
    p1_bytes = (2 * _tile_bytes(tcr, HW, isz) + 2 * _tile_bytes(1, HW, 4)
                + mask_bytes + 2 * _tile_bytes(1, HW, 4) + pad_bytes)
    scale_flat = pl.pallas_call(
        functools.partial(_pool_scale_kernel, C=C, H=H, W=W, tcr=tcr),
        out_shape=jax.ShapeDtypeStruct((B, 1, HW), jnp.float32),
        grid=(B, n_cr),
        in_specs=[pl.BlockSpec((1, tcr, HW), lambda b, c: (b, c, 0))]
                 + smem_specs
                 + [pl.BlockSpec((KSIZE, HW), lambda b, c: (0, 0))],
        out_specs=pl.BlockSpec((1, 1, HW), lambda b, c: (b, 0, 0)),
        scratch_shapes=[pltpu.VMEM((1, HW), jnp.float32),
                        pltpu.VMEM((1, HW), jnp.float32),
                        pltpu.VMEM((2, lpad), jnp.float32)],
        compiler_params=pltpu.CompilerParams(
            dimension_semantics=("parallel", "arbitrary"),
            vmem_limit_bytes=int(p1_bytes * 1.5) + (4 << 20)),
    )(x_flat, w_flat, bn, masks)

    # Pass 2: lane-dense gating; channel axis innermost so the (1, 1, HW) scale
    # block index is unchanged across c steps and stays resident in VMEM.
    tc = _pick_channel_tile(C, HW, isz, gate_budget, bufs=4)
    n_cb = pl.cdiv(C, tc)
    p2_bytes = 4 * _tile_bytes(tc, HW, isz) + 2 * _tile_bytes(1, HW, 4)
    out_flat = pl.pallas_call(
        _gate_kernel,
        out_shape=jax.ShapeDtypeStruct((B, C, HW), x.dtype),
        grid=(B, n_cb),
        in_specs=[pl.BlockSpec((1, tc, HW), lambda b, c: (b, c, 0)),
                  pl.BlockSpec((1, 1, HW), lambda b, c: (b, 0, 0))],
        out_specs=pl.BlockSpec((1, tc, HW), lambda b, c: (b, c, 0)),
        compiler_params=pltpu.CompilerParams(
            dimension_semantics=("parallel", "parallel"),
            vmem_limit_bytes=int(p2_bytes * 1.5) + (4 << 20)),
    )(x_flat, scale_flat)

    return out_flat.reshape(B, C, H, W)


# ----------------------------------------------------------------------------
# Pure-JAX reference (matches PyTorch eval-mode SpatialGate).
# ----------------------------------------------------------------------------
def spatial_gate_reference(x, conv_w, bn_scale, bn_shift):
    mx = jnp.max(x, axis=1, keepdims=True)
    mn = jnp.mean(x, axis=1, keepdims=True)
    pool = jnp.concatenate([mx, mn], axis=1)                   # (B, 2, H, W)
    conv = jax.lax.conv_general_dilated(
        pool, conv_w, window_strides=(1, 1),
        padding=((PAD, PAD), (PAD, PAD)),
        dimension_numbers=("NCHW", "OIHW", "NCHW"))
    return x * jax.nn.sigmoid(conv * bn_scale + bn_shift)


if __name__ == "__main__":
    key = jax.random.PRNGKey(0)
    kx, kw, kg, kb, km, kv, kx2 = jax.random.split(key, 7)

    B, C, H, W = 2, 4, 16, 16
    x = jax.random.normal(kx, (B, C, H, W), dtype=jnp.float32)

    # Deterministic parameter init (synthetic; shapes from the module __init__).
    conv_w = 0.1 * jax.random.normal(kw, (1, 2, KSIZE, KSIZE), dtype=jnp.float32)
    gamma = 1.0 + 0.1 * jax.random.normal(kg, (), dtype=jnp.float32)
    beta = 0.1 * jax.random.normal(kb, (), dtype=jnp.float32)
    running_mean = 0.1 * jax.random.normal(km, (), dtype=jnp.float32)
    running_var = 1.0 + 0.1 * jax.random.uniform(kv, (), dtype=jnp.float32)
    eps = 1e-5

    bn_scale = gamma / jnp.sqrt(running_var + eps)
    bn_shift = beta - running_mean * bn_scale

    # Fused single-pass path (default at this size).
    out = jax.block_until_ready(spatial_gate(x, conv_w, bn_scale, bn_shift))
    ref = spatial_gate_reference(x, conv_w, bn_scale, bn_shift)
    assert out.shape == (B, C, H, W)
    assert jnp.allclose(out, ref, atol=1e-4, rtol=1e-4), "fused path mismatch"

    # Also exercise the two-pass fallback (channel-tiled reduction + gating).
    x2 = jax.random.normal(kx2, (1, 16, 16, 16), dtype=jnp.float32)
    out2 = jax.block_until_ready(
        spatial_gate(x2, conv_w, bn_scale, bn_shift,
                     force_two_pass=True, tile_budget_bytes=20_000))
    ref2 = spatial_gate_reference(x2, conv_w, bn_scale, bn_shift)
    assert jnp.allclose(out2, ref2, atol=1e-4, rtol=1e-4), "two-pass mismatch"

    print("KERNEL_OK")
</pallas_src>

<mosaic_0001>
module attributes {stable_mosaic.version = 11 : i64} {
  func.func @_fused_kernel(%arg0: i32, %arg1: memref<1x4x256xf32, #tpu.memory_space<vmem>>, %arg2: memref<98xf32, #tpu.memory_space<smem>>, %arg3: memref<2xf32, #tpu.memory_space<smem>>, %arg4: memref<7x256xf32, #tpu.memory_space<vmem>>, %arg5: memref<1x4x256xf32, #tpu.memory_space<vmem>>, %arg6: memref<2x435xf32, #tpu.memory_space<vmem>>) attributes {dimension_semantics = [#tpu.dimension_semantics<parallel>], iteration_bounds = array<i64: 2>, scalar_prefetch = 0 : i64, scratch_operands = 1 : i64, tpu.core_type = #tpu.core_type<tc>, window_params = [{transform_indices = @transform_0, window_bounds = array<i64: 1, 4, 256>}, {transform_indices = @transform_1, window_bounds = array<i64: 98>}, {transform_indices = @transform_2, window_bounds = array<i64: 2>}, {pipeline_mode = #tpu.pipeline_mode<synchronous>, transform_indices = @transform_3, window_bounds = array<i64: 7, 256>}, {transform_indices = @transform_4, window_bounds = array<i64: 1, 4, 256>}]} {
    %c0 = arith.constant 0 : index
    %c0_0 = arith.constant 0 : index
    %c0_1 = arith.constant 0 : index
    %0 = vector.load %arg1[%c0, %c0_0, %c0_1] : memref<1x4x256xf32, #tpu.memory_space<vmem>>, vector<1x4x256xf32>
    %1 = vector.shape_cast %0 : vector<1x4x256xf32> to vector<4x256xf32>
    %cst = arith.constant dense<0xFF800000> : vector<256xf32>
    %2 = vector.multi_reduction <maximumf>, %1, %cst [0] : vector<4x256xf32> to vector<256xf32>
    %3 = vector.shape_cast %2 : vector<256xf32> to vector<1x256xf32>
    %cst_2 = arith.constant dense<0.000000e+00> : vector<256xf32>
    %4 = vector.multi_reduction <add>, %1, %cst_2 [0] : vector<4x256xf32> to vector<256xf32>
    %5 = vector.shape_cast %4 : vector<256xf32> to vector<1x256xf32>
    %cst_3 = arith.constant 2.500000e-01 : f32
    %6 = vector.broadcast %cst_3 : f32 to vector<1x256xf32>
    %7 = arith.mulf %5, %6 : vector<1x256xf32>
    %cst_4 = arith.constant 0.000000e+00 : f32
    %8 = vector.broadcast %cst_4 : f32 to vector<2x128xf32>
    %c0_5 = arith.constant 0 : index
    %c0_6 = arith.constant 0 : index
    %9 = vector.load %arg6[%c0_5, %c0_6] : memref<2x435xf32, #tpu.memory_space<vmem>>, vector<2x128xf32>
    tpu.vector_store %arg6[%c0_5, %c0_6], %8 {strides = array<i32>} : memref<2x435xf32, #tpu.memory_space<vmem>>, vector<2x128xf32>,
    %cst_7 = arith.constant 0.000000e+00 : f32
    %10 = vector.broadcast %cst_7 : f32 to vector<2x51xf32>
    %c0_8 = arith.constant 0 : index
    %c384 = arith.constant 384 : index
    %11 = vector.load %arg6[%c0_8, %c384] : memref<2x435xf32, #tpu.memory_space<vmem>>, vector<2x51xf32>
    tpu.vector_store %arg6[%c0_8, %c384], %10 {strides = array<i32>} : memref<2x435xf32, #tpu.memory_space<vmem>>, vector<2x51xf32>,
    %c0_9 = arith.constant 0 : index
    %c128 = arith.constant 128 : index
    %12 = vector.load %arg6[%c0_9, %c128] : memref<2x435xf32, #tpu.memory_space<vmem>>, vector<1x256xf32>
    tpu.vector_store %arg6[%c0_9, %c128], %3 {strides = array<i32>} : memref<2x435xf32, #tpu.memory_space<vmem>>, vector<1x256xf32>,
    %c1 = arith.constant 1 : index
    %c128_10 = arith.constant 128 : index
    %13 = vector.load %arg6[%c1, %c128_10] : memref<2x435xf32, #tpu.memory_space<vmem>>, vector<1x256xf32>
    tpu.vector_store %arg6[%c1, %c128_10], %7 {strides = array<i32>} : memref<2x435xf32, #tpu.memory_space<vmem>>, vector<1x256xf32>,
    %cst_11 = arith.constant 0.000000e+00 : f32
    %14 = vector.broadcast %cst_11 : f32 to vector<1x256xf32>
    %cst_12 = arith.constant 0.000000e+00 : f32
    %15 = vector.broadcast %cst_12 : f32 to vector<1x256xf32>
    %cst_13 = arith.constant 0.000000e+00 : f32
    %16 = vector.broadcast %cst_13 : f32 to vector<1x256xf32>
    %cst_14 = arith.constant 0.000000e+00 : f32
    %17 = vector.broadcast %cst_14 : f32 to vector<1x256xf32>
    %cst_15 = arith.constant 0.000000e+00 : f32
    %18 = vector.broadcast %cst_15 : f32 to vector<1x256xf32>
    %cst_16 = arith.constant 0.000000e+00 : f32
    %19 = vector.broadcast %cst_16 : f32 to vector<1x256xf32>
    %cst_17 = arith.constant 0.000000e+00 : f32
    %20 = vector.broadcast %cst_17 : f32 to vector<1x256xf32>
    %c0_18 = arith.constant 0 : index
    %21 = memref.load %arg2[%c0_18] : memref<98xf32, #tpu.memory_space<smem>>
    %c0_19 = arith.constant 0 : index
    %c77 = arith.constant 77 : index
    %22 = vector.load %arg6[%c0_19, %c77] : memref<2x435xf32, #tpu.memory_space<vmem>>, vector<1x256xf32>
    %23 = vector.broadcast %21 : f32 to vector<1x256xf32>
    %24 = arith.mulf %23, %22 : vector<1x256xf32>
    %25 = arith.addf %14, %24 : vector<1x256xf32>
    %c1_20 = arith.constant 1 : index
    %26 = memref.load %arg2[%c1_20] : memref<98xf32, #tpu.memory_space<smem>>
    %c0_21 = arith.constant 0 : index
    %c78 = arith.constant 78 : index
    %27 = vector.load %arg6[%c0_21, %c78] : memref<2x435xf32, #tpu.memory_space<vmem>>, vector<1x256xf32>
    %28 = vector.broadcast %26 : f32 to vector<1x256xf32>
    %29 = arith.mulf %28, %27 : vector<1x256xf32>
    %30 = arith.addf %15, %29 : vector<1x256xf32>
    %c2 = arith.constant 2 : index
    %31 = memref.load %arg2[%c2] : memref<98xf32, #tpu.memory_space<smem>>
    %c0_22 = arith.constant 0 : index
    %c79 = arith.constant 79 : index
    %32 = vector.load %arg6[%c0_22, %c79] : memref<2x435xf32, #tpu.memory_space<vmem>>, vector<1x256xf32>
    %33 = vector.broadcast %31 : f32 to vector<1x256xf32>
    %34 = arith.mulf %33, %32 : vector<1x256xf32>
    %35 = arith.addf %16, %34 : vector<1x256xf32>
    %c3 = arith.constant 3 : index
    %36 = memref.load %arg2[%c3] : memref<98xf32, #tpu.memory_space<smem>>
    %c0_23 = arith.constant 0 : index
    %c80 = arith.constant 80 : index
    %37 = vector.load %arg6[%c0_23, %c80] : memref<2x435xf32, #tpu.memory_space<vmem>>, vector<1x256xf32>
    %38 = vector.broadcast %36 : f32 to vector<1x256xf32>
    %39 = arith.mulf %38, %37 : vector<1x256xf32>
    %40 = arith.addf %17, %39 : vector<1x256xf32>
    %c4 = arith.constant 4 : index
    %41 = memref.load %arg2[%c4] : memref<98xf32, #tpu.memory_space<smem>>
    %c0_24 = arith.constant 0 : index
    %c81 = arith.constant 81 : index
    %42 = vector.load %arg6[%c0_24, %c81] : memref<2x435xf32, #tpu.memory_space<vmem>>, vector<1x256xf32>
    %43 = vector.broadcast %41 : f32 to vector<1x256xf32>
    %44 = arith.mulf %43, %42 : vector<1x256xf32>
    %45 = arith.addf %18, %44 : vector<1x256xf32>
    %c5 = arith.constant 5 : index
    %46 = memref.load %arg2[%c5] : memref<98xf32, #tpu.memory_space<smem>>
    %c0_25 = arith.constant 0 : index
    %c82 = arith.constant 82 : index
    %47 = vector.load %arg6[%c0_25, %c82] : memref<2x435xf32, #tpu.memory_space<vmem>>, vector<1x256xf32>
    %48 = vector.broadcast %46 : f32 to vector<1x256xf32>
    %49 = arith.mulf %48, %47 : vector<1x256xf32>
    %50 = arith.addf %19, %49 : vector<1x256xf32>
    %c6 = arith.constant 6 : index
    %51 = memref.load %arg2[%c6] : memref<98xf32, #tpu.memory_space<smem>>
    %c0_26 = arith.constant 0 : index
    %c83 = arith.constant 83 : index
    %52 = vector.load %arg6[%c0_26, %c83] : memref<2x435xf32, #tpu.memory_space<vmem>>, vector<1x256xf32>
    %53 = vector.broadcast %51 : f32 to vector<1x256xf32>
    %54 = arith.mulf %53, %52 : vector<1x256xf32>
    %55 = arith.addf %20, %54 : vector<1x256xf32>
    %c7 = arith.constant 7 : index
    %56 = memref.load %arg2[%c7] : memref<98xf32, #tpu.memory_space<smem>>
    %c0_27 = arith.constant 0 : index
    %c93 = arith.constant 93 : index
    %57 = vector.load %arg6[%c0_27, %c93] : memref<2x435xf32, #tpu.memory_space<vmem>>, vector<1x256xf32>
    %58 = vector.broadcast %56 : f32 to vector<1x256xf32>
    %59 = arith.mulf %58, %57 : vector<1x256xf32>
    %60 = arith.addf %25, %59 : vector<1x256xf32>
    %c8 = arith.constant 8 : index
    %61 = memref.load %arg2[%c8] : memref<98xf32, #tpu.memory_space<smem>>
    %c0_28 = arith.constant 0 : index
    %c94 = arith.constant 94 : index
    %62 = vector.load %arg6[%c0_28, %c94] : memref<2x435xf32, #tpu.memory_space<vmem>>, vector<1x256xf32>
    %63 = vector.broadcast %61 : f32 to vector<1x256xf32>
    %64 = arith.mulf %63, %62 : vector<1x256xf32>
    %65 = arith.addf %30, %64 : vector<1x256xf32>
    %c9 = arith.constant 9 : index
    %66 = memref.load %arg2[%c9] : memref<98xf32, #tpu.memory_space<smem>>
    %c0_29 = arith.constant 0 : index
    %c95 = arith.constant 95 : index
    %67 = vector.load %arg6[%c0_29, %c95] : memref<2x435xf32, #tpu.memory_space<vmem>>, vector<1x256xf32>
    %68 = vector.broadcast %66 : f32 to vector<1x256xf32>
    %69 = arith.mulf %68, %67 : vector<1x256xf32>
    %70 = arith.addf %35, %69 : vector<1x256xf32>
    %c10 = arith.constant 10 : index
    %71 = memref.load %arg2[%c10] : memref<98xf32, #tpu.memory_space<smem>>
    %c0_30 = arith.constant 0 : index
    %c96 = arith.constant 96 : index
    %72 = vector.load %arg6[%c0_30, %c96] : memref<2x435xf32, #tpu.memory_space<vmem>>, vector<1x256xf32>
    %73 = vector.broadcast %71 : f32 to vector<1x256xf32>
    %74 = arith.mulf %73, %72 : vector<1x256xf32>
    %75 = arith.addf %40, %74 : vector<1x256xf32>
    %c11 = arith.constant 11 : index
    %76 = memref.load %arg2[%c11] : memref<98xf32, #tpu.memory_space<smem>>
    %c0_31 = arith.constant 0 : index
    %c97 = arith.constant 97 : index
    %77 = vector.load %arg6[%c0_31, %c97] : memref<2x435xf32, #tpu.memory_space<vmem>>, vector<1x256xf32>
    %78 = vector.broadcast %76 : f32 to vector<1x256xf32>
    %79 = arith.mulf %78, %77 : vector<1x256xf32>
    %80 = arith.addf %45, %79 : vector<1x256xf32>
    %c12 = arith.constant 12 : index
    %81 = memref.load %arg2[%c12] : memref<98xf32, #tpu.memory_space<smem>>
    %c0_32 = arith.constant 0 : index
    %c98 = arith.constant 98 : index
    %82 = vector.load %arg6[%c0_32, %c98] : memref<2x435xf32, #tpu.memory_space<vmem>>, vector<1x256xf32>
    %83 = vector.broadcast %81 : f32 to vector<1x256xf32>
    %84 = arith.mulf %83, %82 : vector<1x256xf32>
    %85 = arith.addf %50, %84 : vector<1x256xf32>
    %c13 = arith.constant 13 : index
    %86 = memref.load %arg2[%c13] : memref<98xf32, #tpu.memory_space<smem>>
    %c0_33 = arith.constant 0 : index
    %c99 = arith.constant 99 : index
    %87 = vector.load %arg6[%c0_33, %c99] : memref<2x435xf32, #tpu.memory_space<vmem>>, vector<1x256xf32>
    %88 = vector.broadcast %86 : f32 to vector<1x256xf32>
    %89 = arith.mulf %88, %87 : vector<1x256xf32>
    %90 = arith.addf %55, %89 : vector<1x256xf32>
    %c14 = arith.constant 14 : index
    %91 = memref.load %arg2[%c14] : memref<98xf32, #tpu.memory_space<smem>>
    %c0_34 = arith.constant 0 : index
    %c109 = arith.constant 109 : index
    %92 = vector.load %arg6[%c0_34, %c109] : memref<2x435xf32, #tpu.memory_space<vmem>>, vector<1x256xf32>
    %93 = vector.broadcast %91 : f32 to vector<1x256xf32>
    %94 = arith.mulf %93, %92 : vector<1x256xf32>
    %95 = arith.addf %60, %94 : vector<1x256xf32>
    %c15 = arith.constant 15 : index
    %96 = memref.load %arg2[%c15] : memref<98xf32, #tpu.memory_space<smem>>
    %c0_35 = arith.constant 0 : index
    %c110 = arith.constant 110 : index
    %97 = vector.load %arg6[%c0_35, %c110] : memref<2x435xf32, #tpu.memory_space<vmem>>, vector<1x256xf32>
    %98 = vector.broadcast %96 : f32 to vector<1x256xf32>
    %99 = arith.mulf %98, %97 : vector<1x256xf32>
    %100 = arith.addf %65, %99 : vector<1x256xf32>
    %c16 = arith.constant 16 : index
    %101 = memref.load %arg2[%c16] : memref<98xf32, #tpu.memory_space<smem>>
    %c0_36 = arith.constant 0 : index
    %c111 = arith.constant 111 : index
    %102 = vector.load %arg6[%c0_36, %c111] : memref<2x435xf32, #tpu.memory_space<vmem>>, vector<1x256xf32>
    %103 = vector.broadcast %101 : f32 to vector<1x256xf32>
    %104 = arith.mulf %103, %102 : vector<1x256xf32>
    %105 = arith.addf %70, %104 : vector<1x256xf32>
    %c17 = arith.constant 17 : index
    %106 = memref.load %arg2[%c17] : memref<98xf32, #tpu.memory_space<smem>>
    %c0_37 = arith.constant 0 : index
    %c112 = arith.constant 112 : index
    %107 = vector.load %arg6[%c0_37, %c112] : memref<2x435xf32, #tpu.memory_space<vmem>>, vector<1x256xf32>
    %108 = vector.broadcast %106 : f32 to vector<1x256xf32>
    %109 = arith.mulf %108, %107 : vector<1x256xf32>
    %110 = arith.addf %75, %109 : vector<1x256xf32>
    %c18 = arith.constant 18 : index
    %111 = memref.load %arg2[%c18] : memref<98xf32, #tpu.memory_space<smem>>
    %c0_38 = arith.constant 0 : index
    %c113 = arith.constant 113 : index
    %112 = vector.load %arg6[%c0_38, %c113] : memref<2x435xf32, #tpu.memory_space<vmem>>, vector<1x256xf32>
    %113 = vector.broadcast %111 : f32 to vector<1x256xf32>
    %114 = arith.mulf %113, %112 : vector<1x256xf32>
    %115 = arith.addf %80, %114 : vector<1x256xf32>
    %c19 = arith.constant 19 : index
    %116 = memref.load %arg2[%c19] : memref<98xf32, #tpu.memory_space<smem>>
    %c0_39 = arith.constant 0 : index
    %c114 = arith.constant 114 : index
    %117 = vector.load %arg6[%c0_39, %c114] : memref<2x435xf32, #tpu.memory_space<vmem>>, vector<1x256xf32>
    %118 = vector.broadcast %116 : f32 to vector<1x256xf32>
    %119 = arith.mulf %118, %117 : vector<1x256xf32>
    %120 = arith.addf %85, %119 : vector<1x256xf32>
    %c20 = arith.constant 20 : index
    %121 = memref.load %arg2[%c20] : memref<98xf32, #tpu.memory_space<smem>>
    %c0_40 = arith.constant 0 : index
    %c115 = arith.constant 115 : index
    %122 = vector.load %arg6[%c0_40, %c115] : memref<2x435xf32, #tpu.memory_space<vmem>>, vector<1x256xf32>
    %123 = vector.broadcast %121 : f32 to vector<1x256xf32>
    %124 = arith.mulf %123, %122 : vector<1x256xf32>
    %125 = arith.addf %90, %124 : vector<1x256xf32>
    %c21 = arith.constant 21 : index
    %126 = memref.load %arg2[%c21] : memref<98xf32, #tpu.memory_space<smem>>
    %c0_41 = arith.constant 0 : index
    %c125 = arith.constant 125 : index
    %127 = vector.load %arg6[%c0_41, %c125] : memref<2x435xf32, #tpu.memory_space<vmem>>, vector<1x256xf32>
    %128 = vector.broadcast %126 : f32 to vector<1x256xf32>
    %129 = arith.mulf %128, %127 : vector<1x256xf32>
    %130 = arith.addf %95, %129 : vector<1x256xf32>
    %c22 = arith.constant 22 : index
    %131 = memref.load %arg2[%c22] : memref<98xf32, #tpu.memory_space<smem>>
    %c0_42 = arith.constant 0 : index
    %c126 = arith.constant 126 : index
    %132 = vector.load %arg6[%c0_42, %c126] : memref<2x435xf32, #tpu.memory_space<vmem>>, vector<1x256xf32>
    %133 = vector.broadcast %131 : f32 to vector<1x256xf32>
    %134 = arith.mulf %133, %132 : vector<1x256xf32>
    %135 = arith.addf %100, %134 : vector<1x256xf32>
    %c23 = arith.constant 23 : index
    %136 = memref.load %arg2[%c23] : memref<98xf32, #tpu.memory_space<smem>>
    %c0_43 = arith.constant 0 : index
    %c127 = arith.constant 127 : index
    %137 = vector.load %arg6[%c0_43, %c127] : memref<2x435xf32, #tpu.memory_space<vmem>>, vector<1x256xf32>
    %138 = vector.broadcast %136 : f32 to vector<1x256xf32>
    %139 = arith.mulf %138, %137 : vector<1x256xf32>
    %140 = arith.addf %105, %139 : vector<1x256xf32>
    %c24 = arith.constant 24 : index
    %141 = memref.load %arg2[%c24] : memref<98xf32, #tpu.memory_space<smem>>
    %c0_44 = arith.constant 0 : index
    %c128_45 = arith.constant 128 : index
    %142 = vector.load %arg6[%c0_44, %c128_45] : memref<2x435xf32, #tpu.memory_space<vmem>>, vector<1x256xf32>
    %143 = vector.broadcast %141 : f32 to vector<1x256xf32>
    %144 = arith.mulf %143, %142 : vector<1x256xf32>
    %145 = arith.addf %110, %144 : vector<1x256xf32>
    %c25 = arith.constant 25 : index
    %146 = memref.load %arg2[%c25] : memref<98xf32, #tpu.memory_space<smem>>
    %c0_46 = arith.constant 0 : index
    %c129 = arith.constant 129 : index
    %147 = vector.load %arg6[%c0_46, %c129] : memref<2x435xf32, #tpu.memory_space<vmem>>, vector<1x256xf32>
    %148 = vector.broadcast %146 : f32 to vector<1x256xf32>
    %149 = arith.mulf %148, %147 : vector<1x256xf32>
    %150 = arith.addf %115, %149 : vector<1x256xf32>
    %c26 = arith.constant 26 : index
    %151 = memref.load %arg2[%c26] : memref<98xf32, #tpu.memory_space<smem>>
    %c0_47 = arith.constant 0 : index
    %c130 = arith.constant 130 : index
    %152 = vector.load %arg6[%c0_47, %c130] : memref<2x435xf32, #tpu.memory_space<vmem>>, vector<1x256xf32>
    %153 = vector.broadcast %151 : f32 to vector<1x256xf32>
    %154 = arith.mulf %153, %152 : vector<1x256xf32>
    %155 = arith.addf %120, %154 : vector<1x256xf32>
    %c27 = arith.constant 27 : index
    %156 = memref.load %arg2[%c27] : memref<98xf32, #tpu.memory_space<smem>>
    %c0_48 = arith.constant 0 : index
    %c131 = arith.constant 131 : index
    %157 = vector.load %arg6[%c0_48, %c131] : memref<2x435xf32, #tpu.memory_space<vmem>>, vector<1x256xf32>
    %158 = vector.broadcast %156 : f32 to vector<1x256xf32>
    %159 = arith.mulf %158, %157 : vector<1x256xf32>
    %160 = arith.addf %125, %159 : vector<1x256xf32>
    %c28 = arith.constant 28 : index
    %161 = memref.load %arg2[%c28] : memref<98xf32, #tpu.memory_space<smem>>
    %c0_49 = arith.constant 0 : index
    %c141 = arith.constant 141 : index
    %162 = vector.load %arg6[%c0_49, %c141] : memref<2x435xf32, #tpu.memory_space<vmem>>, vector<1x256xf32>
    %163 = vector.broadcast %161 : f32 to vector<1x256xf32>
    %164 = arith.mulf %163, %162 : vector<1x256xf32>
    %165 = arith.addf %130, %164 : vector<1x256xf32>
    %c29 = arith.constant 29 : index
    %166 = memref.load %arg2[%c29] : memref<98xf32, #tpu.memory_space<smem>>
    %c0_50 = arith.constant 0 : index
    %c142 = arith.constant 142 : index
    %167 = vector.load %arg6[%c0_50, %c142] : memref<2x435xf32, #tpu.memory_space<vmem>>, vector<1x256xf32>
    %168 = vector.broadcast %166 : f32 to vector<1x256xf32>
    %169 = arith.mulf %168, %167 : vector<1x256xf32>
    %170 = arith.addf %135, %169 : vector<1x256xf32>
    %c30 = arith.constant 30 : index
    %171 = memref.load %arg2[%c30] : memref<98xf32, #tpu.memory_space<smem>>
    %c0_51 = arith.constant 0 : index
    %c143 = arith.constant 143 : index
    %172 = vector.load %arg6[%c0_51, %c143] : memref<2x435xf32, #tpu.memory_space<vmem>>, vector<1x256xf32>
    %173 = vector.broadcast %171 : f32 to vector<1x256xf32>
    %174 = arith.mulf %173, %172 : vector<1x256xf32>
    %175 = arith.addf %140, %174 : vector<1x256xf32>
    %c31 = arith.constant 31 : index
    %176 = memref.load %arg2[%c31] : memref<98xf32, #tpu.memory_space<smem>>
    %c0_52 = arith.constant 0 : index
    %c144 = arith.constant 144 : index
    %177 = vector.load %arg6[%c0_52, %c144] : memref<2x435xf32, #tpu.memory_space<vmem>>, vector<1x256xf32>
    %178 = vector.broadcast %176 : f32 to vector<1x256xf32>
    %179 = arith.mulf %178, %177 : vector<1x256xf32>
    %180 = arith.addf %145, %179 : vector<1x256xf32>
    %c32 = arith.constant 32 : index
    %181 = memref.load %arg2[%c32] : memref<98xf32, #tpu.memory_space<smem>>
    %c0_53 = arith.constant 0 : index
    %c145 = arith.constant 145 : index
    %182 = vector.load %arg6[%c0_53, %c145] : memref<2x435xf32, #tpu.memory_space<vmem>>, vector<1x256xf32>
    %183 = vector.broadcast %181 : f32 to vector<1x256xf32>
    %184 = arith.mulf %183, %182 : vector<1x256xf32>
    %185 = arith.addf %150, %184 : vector<1x256xf32>
    %c33 = arith.constant 33 : index
    %186 = memref.load %arg2[%c33] : memref<98xf32, #tpu.memory_space<smem>>
    %c0_54 = arith.constant 0 : index
    %c146 = arith.constant 146 : index
    %187 = vector.load %arg6[%c0_54, %c146] : memref<2x435xf32, #tpu.memory_space<vmem>>, vector<1x256xf32>
    %188 = vector.broadcast %186 : f32 to vector<1x256xf32>
    %189 = arith.mulf %188, %187 : vector<1x256xf32>
    %190 = arith.addf %155, %189 : vector<1x256xf32>
    %c34 = arith.constant 34 : index
    %191 = memref.load %arg2[%c34] : memref<98xf32, #tpu.memory_space<smem>>
    %c0_55 = arith.constant 0 : index
    %c147 = arith.constant 147 : index
    %192 = vector.load %arg6[%c0_55, %c147] : memref<2x435xf32, #tpu.memory_space<vmem>>, vector<1x256xf32>
    %193 = vector.broadcast %191 : f32 to vector<1x256xf32>
    %194 = arith.mulf %193, %192 : vector<1x256xf32>
    %195 = arith.addf %160, %194 : vector<1x256xf32>
    %c35 = arith.constant 35 : index
    %196 = memref.load %arg2[%c35] : memref<98xf32, #tpu.memory_space<smem>>
    %c0_56 = arith.constant 0 : index
    %c157 = arith.constant 157 : index
    %197 = vector.load %arg6[%c0_56, %c157] : memref<2x435xf32, #tpu.memory_space<vmem>>, vector<1x256xf32>
    %198 = vector.broadcast %196 : f32 to vector<1x256xf32>
    %199 = arith.mulf %198, %197 : vector<1x256xf32>
    %200 = arith.addf %165, %199 : vector<1x256xf32>
    %c36 = arith.constant 36 : index
    %201 = memref.load %arg2[%c36] : memref<98xf32, #tpu.memory_space<smem>>
    %c0_57 = arith.constant 0 : index
    %c158 = arith.constant 158 : index
    %202 = vector.load %arg6[%c0_57, %c158] : memref<2x435xf32, #tpu.memory_space<vmem>>, vector<1x256xf32>
    %203 = vector.broadcast %201 : f32 to vector<1x256xf32>
    %204 = arith.mulf %203, %202 : vector<1x256xf32>
    %205 = arith.addf %170, %204 : vector<1x256xf32>
    %c37 = arith.constant 37 : index
    %206 = memref.load %arg2[%c37] : memref<98xf32, #tpu.memory_space<smem>>
    %c0_58 = arith.constant 0 : index
    %c159 = arith.constant 159 : index
    %207 = vector.load %arg6[%c0_58, %c159] : memref<2x435xf32, #tpu.memory_space<vmem>>, vector<1x256xf32>
    %208 = vector.broadcast %206 : f32 to vector<1x256xf32>
    %209 = arith.mulf %208, %207 : vector<1x256xf32>
    %210 = arith.addf %175, %209 : vector<1x256xf32>
    %c38 = arith.constant 38 : index
    %211 = memref.load %arg2[%c38] : memref<98xf32, #tpu.memory_space<smem>>
    %c0_59 = arith.constant 0 : index
    %c160 = arith.constant 160 : index
    %212 = vector.load %arg6[%c0_59, %c160] : memref<2x435xf32, #tpu.memory_space<vmem>>, vector<1x256xf32>
    %213 = vector.broadcast %211 : f32 to vector<1x256xf32>
    %214 = arith.mulf %213, %212 : vector<1x256xf32>
    %215 = arith.addf %180, %214 : vector<1x256xf32>
    %c39 = arith.constant 39 : index
    %216 = memref.load %arg2[%c39] : memref<98xf32, #tpu.memory_space<smem>>
    %c0_60 = arith.constant 0 : index
    %c161 = arith.constant 161 : index
    %217 = vector.load %arg6[%c0_60, %c161] : memref<2x435xf32, #tpu.memory_space<vmem>>, vector<1x256xf32>
    %218 = vector.broadcast %216 : f32 to vector<1x256xf32>
    %219 = arith.mulf %218, %217 : vector<1x256xf32>
    %220 = arith.addf %185, %219 : vector<1x256xf32>
    %c40 = arith.constant 40 : index
    %221 = memref.load %arg2[%c40] : memref<98xf32, #tpu.memory_space<smem>>
    %c0_61 = arith.constant 0 : index
    %c162 = arith.constant 162 : index
    %222 = vector.load %arg6[%c0_61, %c162] : memref<2x435xf32, #tpu.memory_space<vmem>>, vector<1x256xf32>
    %223 = vector.broadcast %221 : f32 to vector<1x256xf32>
    %224 = arith.mulf %223, %222 : vector<1x256xf32>
    %225 = arith.addf %190, %224 : vector<1x256xf32>
    %c41 = arith.constant 41 : index
    %226 = memref.load %arg2[%c41] : memref<98xf32, #tpu.memory_space<smem>>
    %c0_62 = arith.constant 0 : index
    %c163 = arith.constant 163 : index
    %227 = vector.load %arg6[%c0_62, %c163] : memref<2x435xf32, #tpu.memory_space<vmem>>, vector<1x256xf32>
    %228 = vector.broadcast %226 : f32 to vector<1x256xf32>
    %229 = arith.mulf %228, %227 : vector<1x256xf32>
    %230 = arith.addf %195, %229 : vector<1x256xf32>
    %c42 = arith.constant 42 : index
    %231 = memref.load %arg2[%c42] : memref<98xf32, #tpu.memory_space<smem>>
    %c0_63 = arith.constant 0 : index
    %c173 = arith.constant 173 : index
    %232 = vector.load %arg6[%c0_63, %c173] : memref<2x435xf32, #tpu.memory_space<vmem>>, vector<1x256xf32>
    %233 = vector.broadcast %231 : f32 to vector<1x256xf32>
    %234 = arith.mulf %233, %232 : vector<1x256xf32>
    %235 = arith.addf %200, %234 : vector<1x256xf32>
    %c43 = arith.constant 43 : index
    %236 = memref.load %arg2[%c43] : memref<98xf32, #tpu.memory_space<smem>>
    %c0_64 = arith.constant 0 : index
    %c174 = arith.constant 174 : index
    %237 = vector.load %arg6[%c0_64, %c174] : memref<2x435xf32, #tpu.memory_space<vmem>>, vector<1x256xf32>
    %238 = vector.broadcast %236 : f32 to vector<1x256xf32>
    %239 = arith.mulf %238, %237 : vector<1x256xf32>
    %240 = arith.addf %205, %239 : vector<1x256xf32>
    %c44 = arith.constant 44 : index
    %241 = memref.load %arg2[%c44] : memref<98xf32, #tpu.memory_space<smem>>
    %c0_65 = arith.constant 0 : index
    %c175 = arith.constant 175 : index
    %242 = vector.load %arg6[%c0_65, %c175] : memref<2x435xf32, #tpu.memory_space<vmem>>, vector<1x256xf32>
    %243 = vector.broadcast %241 : f32 to vector<1x256xf32>
    %244 = arith.mulf %243, %242 : vector<1x256xf32>
    %245 = arith.addf %210, %244 : vector<1x256xf32>
    %c45 = arith.constant 45 : index
    %246 = memref.load %arg2[%c45] : memref<98xf32, #tpu.memory_space<smem>>
    %c0_66 = arith.constant 0 : index
    %c176 = arith.constant 176 : index
    %247 = vector.load %arg6[%c0_66, %c176] : memref<2x435xf32, #tpu.memory_space<vmem>>, vector<1x256xf32>
    %248 = vector.broadcast %246 : f32 to vector<1x256xf32>
    %249 = arith.mulf %248, %247 : vector<1x256xf32>
    %250 = arith.addf %215, %249 : vector<1x256xf32>
    %c46 = arith.constant 46 : index
    %251 = memref.load %arg2[%c46] : memref<98xf32, #tpu.memory_space<smem>>
    %c0_67 = arith.constant 0 : index
    %c177 = arith.constant 177 : index
    %252 = vector.load %arg6[%c0_67, %c177] : memref<2x435xf32, #tpu.memory_space<vmem>>, vector<1x256xf32>
    %253 = vector.broadcast %251 : f32 to vector<1x256xf32>
    %254 = arith.mulf %253, %252 : vector<1x256xf32>
    %255 = arith.addf %220, %254 : vector<1x256xf32>
    %c47 = arith.constant 47 : index
    %256 = memref.load %arg2[%c47] : memref<98xf32, #tpu.memory_space<smem>>
    %c0_68 = arith.constant 0 : index
    %c178 = arith.constant 178 : index
    %257 = vector.load %arg6[%c0_68, %c178] : memref<2x435xf32, #tpu.memory_space<vmem>>, vector<1x256xf32>
    %258 = vector.broadcast %256 : f32 to vector<1x256xf32>
    %259 = arith.mulf %258, %257 : vector<1x256xf32>
    %260 = arith.addf %225, %259 : vector<1x256xf32>
    %c48 = arith.constant 48 : index
    %261 = memref.load %arg2[%c48] : memref<98xf32, #tpu.memory_space<smem>>
    %c0_69 = arith.constant 0 : index
    %c179 = arith.constant 179 : index
    %262 = vector.load %arg6[%c0_69, %c179] : memref<2x435xf32, #tpu.memory_space<vmem>>, vector<1x256xf32>
    %263 = vector.broadcast %261 : f32 to vector<1x256xf32>
    %264 = arith.mulf %263, %262 : vector<1x256xf32>
    %265 = arith.addf %230, %264 : vector<1x256xf32>
    %c49 = arith.constant 49 : index
    %266 = memref.load %arg2[%c49] : memref<98xf32, #tpu.memory_space<smem>>
    %c1_70 = arith.constant 1 : index
    %c77_71 = arith.constant 77 : index
    %267 = vector.load %arg6[%c1_70, %c77_71] : memref<2x435xf32, #tpu.memory_space<vmem>>, vector<1x256xf32>
    %268 = vector.broadcast %266 : f32 to vector<1x256xf32>
    %269 = arith.mulf %268, %267 : vector<1x256xf32>
    %270 = arith.addf %235, %269 : vector<1x256xf32>
    %c50 = arith.constant 50 : index
    %271 = memref.load %arg2[%c50] : memref<98xf32, #tpu.memory_space<smem>>
    %c1_72 = arith.constant 1 : index
    %c78_73 = arith.constant 78 : index
    %272 = vector.load %arg6[%c1_72, %c78_73] : memref<2x435xf32, #tpu.memory_space<vmem>>, vector<1x256xf32>
    %273 = vector.broadcast %271 : f32 to vector<1x256xf32>
    %274 = arith.mulf %273, %272 : vector<1x256xf32>
    %275 = arith.addf %240, %274 : vector<1x256xf32>
    %c51 = arith.constant 51 : index
    %276 = memref.load %arg2[%c51] : memref<98xf32, #tpu.memory_space<smem>>
    %c1_74 = arith.constant 1 : index
    %c79_75 = arith.constant 79 : index
    %277 = vector.load %arg6[%c1_74, %c79_75] : memref<2x435xf32, #tpu.memory_space<vmem>>, vector<1x256xf32>
    %278 = vector.broadcast %276 : f32 to vector<1x256xf32>
    %279 = arith.mulf %278, %277 : vector<1x256xf32>
    %280 = arith.addf %245, %279 : vector<1x256xf32>
    %c52 = arith.constant 52 : index
    %281 = memref.load %arg2[%c52] : memref<98xf32, #tpu.memory_space<smem>>
    %c1_76 = arith.constant 1 : index
    %c80_77 = arith.constant 80 : index
    %282 = vector.load %arg6[%c1_76, %c80_77] : memref<2x435xf32, #tpu.memory_space<vmem>>, vector<1x256xf32>
    %283 = vector.broadcast %281 : f32 to vector<1x256xf32>
    %284 = arith.mulf %283, %282 : vector<1x256xf32>
    %285 = arith.addf %250, %284 : vector<1x256xf32>
    %c53 = arith.constant 53 : index
    %286 = memref.load %arg2[%c53] : memref<98xf32, #tpu.memory_space<smem>>
    %c1_78 = arith.constant 1 : index
    %c81_79 = arith.constant 81 : index
    %287 = vector.load %arg6[%c1_78, %c81_79] : memref<2x435xf32, #tpu.memory_space<vmem>>, vector<1x256xf32>
    %288 = vector.broadcast %286 : f32 to vector<1x256xf32>
    %289 = arith.mulf %288, %287 : vector<1x256xf32>
    %290 = arith.addf %255, %289 : vector<1x256xf32>
    %c54 = arith.constant 54 : index
    %291 = memref.load %arg2[%c54] : memref<98xf32, #tpu.memory_space<smem>>
    %c1_80 = arith.constant 1 : index
    %c82_81 = arith.constant 82 : index
    %292 = vector.load %arg6[%c1_80, %c82_81] : memref<2x435xf32, #tpu.memory_space<vmem>>, vector<1x256xf32>
    %293 = vector.broadcast %291 : f32 to vector<1x256xf32>
    %294 = arith.mulf %293, %292 : vector<1x256xf32>
    %295 = arith.addf %260, %294 : vector<1x256xf32>
    %c55 = arith.constant 55 : index
    %296 = memref.load %arg2[%c55] : memref<98xf32, #tpu.memory_space<smem>>
    %c1_82 = arith.constant 1 : index
    %c83_83 = arith.constant 83 : index
    %297 = vector.load %arg6[%c1_82, %c83_83] : memref<2x435xf32, #tpu.memory_space<vmem>>, vector<1x256xf32>
    %298 = vector.broadcast %296 : f32 to vector<1x256xf32>
    %299 = arith.mulf %298, %297 : vector<1x256xf32>
    %300 = arith.addf %265, %299 : vector<1x256xf32>
    %c56 = arith.constant 56 : index
    %301 = memref.load %arg2[%c56] : memref<98xf32, #tpu.memory_space<smem>>
    %c1_84 = arith.constant 1 : index
    %c93_85 = arith.constant 93 : index
    %302 = vector.load %arg6[%c1_84, %c93_85] : memref<2x435xf32, #tpu.memory_space<vmem>>, vector<1x256xf32>
    %303 = vector.broadcast %301 : f32 to vector<1x256xf32>
    %304 = arith.mulf %303, %302 : vector<1x256xf32>
    %305 = arith.addf %270, %304 : vector<1x256xf32>
    %c57 = arith.constant 57 : index
    %306 = memref.load %arg2[%c57] : memref<98xf32, #tpu.memory_space<smem>>
    %c1_86 = arith.constant 1 : index
    %c94_87 = arith.constant 94 : index
    %307 = vector.load %arg6[%c1_86, %c94_87] : memref<2x435xf32, #tpu.memory_space<vmem>>, vector<1x256xf32>
    %308 = vector.broadcast %306 : f32 to vector<1x256xf32>
    %309 = arith.mulf %308, %307 : vector<1x256xf32>
    %310 = arith.addf %275, %309 : vector<1x256xf32>
    %c58 = arith.constant 58 : index
    %311 = memref.load %arg2[%c58] : memref<98xf32, #tpu.memory_space<smem>>
    %c1_88 = arith.constant 1 : index
    %c95_89 = arith.constant 95 : index
    %312 = vector.load %arg6[%c1_88, %c95_89] : memref<2x435xf32, #tpu.memory_space<vmem>>, vector<1x256xf32>
    %313 = vector.broadcast %311 : f32 to vector<1x256xf32>
    %314 = arith.mulf %313, %312 : vector<1x256xf32>
    %315 = arith.addf %280, %314 : vector<1x256xf32>
    %c59 = arith.constant 59 : index
    %316 = memref.load %arg2[%c59] : memref<98xf32, #tpu.memory_space<smem>>
    %c1_90 = arith.constant 1 : index
    %c96_91 = arith.constant 96 : index
    %317 = vector.load %arg6[%c1_90, %c96_91] : memref<2x435xf32, #tpu.memory_space<vmem>>, vector<1x256xf32>
    %318 = vector.broadcast %316 : f32 to vector<1x256xf32>
    %319 = arith.mulf %318, %317 : vector<1x256xf32>
    %320 = arith.addf %285, %319 : vector<1x256xf32>
    %c60 = arith.constant 60 : index
    %321 = memref.load %arg2[%c60] : memref<98xf32, #tpu.memory_space<smem>>
    %c1_92 = arith.constant 1 : index
    %c97_93 = arith.constant 97 : index
    %322 = vector.load %arg6[%c1_92, %c97_93] : memref<2x435xf32, #tpu.memory_space<vmem>>, vector<1x256xf32>
    %323 = vector.broadcast %321 : f32 to vector<1x256xf32>
    %324 = arith.mulf %323, %322 : vector<1x256xf32>
    %325 = arith.addf %290, %324 : vector<1x256xf32>
    %c61 = arith.constant 61 : index
    %326 = memref.load %arg2[%c61] : memref<98xf32, #tpu.memory_space<smem>>
    %c1_94 = arith.constant 1 : index
    %c98_95 = arith.constant 98 : index
    %327 = vector.load %arg6[%c1_94, %c98_95] : memref<2x435xf32, #tpu.memory_space<vmem>>, vector<1x256xf32>
    %328 = vector.broadcast %326 : f32 to vector<1x256xf32>
    %329 = arith.mulf %328, %327 : vector<1x256xf32>
    %330 = arith.addf %295, %329 : vector<1x256xf32>
    %c62 = arith.constant 62 : index
    %331 = memref.load %arg2[%c62] : memref<98xf32, #tpu.memory_space<smem>>
    %c1_96 = arith.constant 1 : index
    %c99_97 = arith.constant 99 : index
    %332 = vector.load %arg6[%c1_96, %c99_97] : memref<2x435xf32, #tpu.memory_space<vmem>>, vector<1x256xf32>
    %333 = vector.broadcast %331 : f32 to vector<1x256xf32>
    %334 = arith.mulf %333, %332 : vector<1x256xf32>
    %335 = arith.addf %300, %334 : vector<1x256xf32>
    %c63 = arith.constant 63 : index
    %336 = memref.load %arg2[%c63] : memref<98xf32, #tpu.memory_space<smem>>
    %c1_98 = arith.constant 1 : index
    %c109_99 = arith.constant 109 : index
    %337 = vector.load %arg6[%c1_98, %c109_99] : memref<2x435xf32, #tpu.memory_space<vmem>>, vector<1x256xf32>
    %338 = vector.broadcast %336 : f32 to vector<1x256xf32>
    %339 = arith.mulf %338, %337 : vector<1x256xf32>
    %340 = arith.addf %305, %339 : vector<1x256xf32>
    %c64 = arith.constant 64 : index
    %341 = memref.load %arg2[%c64] : memref<98xf32, #tpu.memory_space<smem>>
    %c1_100 = arith.constant 1 : index
    %c110_101 = arith.constant 110 : index
    %342 = vector.load %arg6[%c1_100, %c110_101] : memref<2x435xf32, #tpu.memory_space<vmem>>, vector<1x256xf32>
    %343 = vector.broadcast %341 : f32 to vector<1x256xf32>
    %344 = arith.mulf %343, %342 : vector<1x256xf32>
    %345 = arith.addf %310, %344 : vector<1x256xf32>
    %c65 = arith.constant 65 : index
    %346 = memref.load %arg2[%c65] : memref<98xf32, #tpu.memory_space<smem>>
    %c1_102 = arith.constant 1 : index
    %c111_103 = arith.constant 111 : index
    %347 = vector.load %arg6[%c1_102, %c111_103] : memref<2x435xf32, #tpu.memory_space<vmem>>, vector<1x256xf32>
    %348 = vector.broadcast %346 : f32 to vector<1x256xf32>
    %349 = arith.mulf %348, %347 : vector<1x256xf32>
    %350 = arith.addf %315, %349 : vector<1x256xf32>
    %c66 = arith.constant 66 : index
    %351 = memref.load %arg2[%c66] : memref<98xf32, #tpu.memory_space<smem>>
    %c1_104 = arith.constant 1 : index
    %c112_105 = arith.constant 112 : index
    %352 = vector.load %arg6[%c1_104, %c112_105] : memref<2x435xf32, #tpu.memory_space<vmem>>, vector<1x256xf32>
    %353 = vector.broadcast %351 : f32 to vector<1x256xf32>
    %354 = arith.mulf %353, %352 : vector<1x256xf32>
    %355 = arith.addf %320, %354 : vector<1x256xf32>
    %c67 = arith.constant 67 : index
    %356 = memref.load %arg2[%c67] : memref<98xf32, #tpu.memory_space<smem>>
    %c1_106 = arith.constant 1 : index
    %c113_107 = arith.constant 113 : index
    %357 = vector.load %arg6[%c1_106, %c113_107] : memref<2x435xf32, #tpu.memory_space<vmem>>, vector<1x256xf32>
    %358 = vector.broadcast %356 : f32 to vector<1x256xf32>
    %359 = arith.mulf %358, %357 : vector<1x256xf32>
    %360 = arith.addf %325, %359 : vector<1x256xf32>
    %c68 = arith.constant 68 : index
    %361 = memref.load %arg2[%c68] : memref<98xf32, #tpu.memory_space<smem>>
    %c1_108 = arith.constant 1 : index
    %c114_109 = arith.constant 114 : index
    %362 = vector.load %arg6[%c1_108, %c114_109] : memref<2x435xf32, #tpu.memory_space<vmem>>, vector<1x256xf32>
    %363 = vector.broadcast %361 : f32 to vector<1x256xf32>
    %364 = arith.mulf %363, %362 : vector<1x256xf32>
    %365 = arith.addf %330, %364 : vector<1x256xf32>
    %c69 = arith.constant 69 : index
    %366 = memref.load %arg2[%c69] : memref<98xf32, #tpu.memory_space<smem>>
    %c1_110 = arith.constant 1 : index
    %c115_111 = arith.constant 115 : index
    %367 = vector.load %arg6[%c1_110, %c115_111] : memref<2x435xf32, #tpu.memory_space<vmem>>, vector<1x256xf32>
    %368 = vector.broadcast %366 : f32 to vector<1x256xf32>
    %369 = arith.mulf %368, %367 : vector<1x256xf32>
    %370 = arith.addf %335, %369 : vector<1x256xf32>
    %c70 = arith.constant 70 : index
    %371 = memref.load %arg2[%c70] : memref<98xf32, #tpu.memory_space<smem>>
    %c1_112 = arith.constant 1 : index
    %c125_113 = arith.constant 125 : index
    %372 = vector.load %arg6[%c1_112, %c125_113] : memref<2x435xf32, #tpu.memory_space<vmem>>, vector<1x256xf32>
    %373 = vector.broadcast %371 : f32 to vector<1x256xf32>
    %374 = arith.mulf %373, %372 : vector<1x256xf32>
    %375 = arith.addf %340, %374 : vector<1x256xf32>
    %c71 = arith.constant 71 : index
    %376 = memref.load %arg2[%c71] : memref<98xf32, #tpu.memory_space<smem>>
    %c1_114 = arith.constant 1 : index
    %c126_115 = arith.constant 126 : index
    %377 = vector.load %arg6[%c1_114, %c126_115] : memref<2x435xf32, #tpu.memory_space<vmem>>, vector<1x256xf32>
    %378 = vector.broadcast %376 : f32 to vector<1x256xf32>
    %379 = arith.mulf %378, %377 : vector<1x256xf32>
    %380 = arith.addf %345, %379 : vector<1x256xf32>
    %c72 = arith.constant 72 : index
    %381 = memref.load %arg2[%c72] : memref<98xf32, #tpu.memory_space<smem>>
    %c1_116 = arith.constant 1 : index
    %c127_117 = arith.constant 127 : index
    %382 = vector.load %arg6[%c1_116, %c127_117] : memref<2x435xf32, #tpu.memory_space<vmem>>, vector<1x256xf32>
    %383 = vector.broadcast %381 : f32 to vector<1x256xf32>
    %384 = arith.mulf %383, %382 : vector<1x256xf32>
    %385 = arith.addf %350, %384 : vector<1x256xf32>
    %c73 = arith.constant 73 : index
    %386 = memref.load %arg2[%c73] : memref<98xf32, #tpu.memory_space<smem>>
    %c1_118 = arith.constant 1 : index
    %c128_119 = arith.constant 128 : index
    %387 = vector.load %arg6[%c1_118, %c128_119] : memref<2x435xf32, #tpu.memory_space<vmem>>, vector<1x256xf32>
    %388 = vector.broadcast %386 : f32 to vector<1x256xf32>
    %389 = arith.mulf %388, %387 : vector<1x256xf32>
    %390 = arith.addf %355, %389 : vector<1x256xf32>
    %c74 = arith.constant 74 : index
    %391 = memref.load %arg2[%c74] : memref<98xf32, #tpu.memory_space<smem>>
    %c1_120 = arith.constant 1 : index
    %c129_121 = arith.constant 129 : index
    %392 = vector.load %arg6[%c1_120, %c129_121] : memref<2x435xf32, #tpu.memory_space<vmem>>, vector<1x256xf32>
    %393 = vector.broadcast %391 : f32 to vector<1x256xf32>
    %394 = arith.mulf %393, %392 : vector<1x256xf32>
    %395 = arith.addf %360, %394 : vector<1x256xf32>
    %c75 = arith.constant 75 : index
    %396 = memref.load %arg2[%c75] : memref<98xf32, #tpu.memory_space<smem>>
    %c1_122 = arith.constant 1 : index
    %c130_123 = arith.constant 130 : index
    %397 = vector.load %arg6[%c1_122, %c130_123] : memref<2x435xf32, #tpu.memory_space<vmem>>, vector<1x256xf32>
    %398 = vector.broadcast %396 : f32 to vector<1x256xf32>
    %399 = arith.mulf %398, %397 : vector<1x256xf32>
    %400 = arith.addf %365, %399 : vector<1x256xf32>
    %c76 = arith.constant 76 : index
    %401 = memref.load %arg2[%c76] : memref<98xf32, #tpu.memory_space<smem>>
    %c1_124 = arith.constant 1 : index
    %c131_125 = arith.constant 131 : index
    %402 = vector.load %arg6[%c1_124, %c131_125] : memref<2x435xf32, #tpu.memory_space<vmem>>, vector<1x256xf32>
    %403 = vector.broadcast %401 : f32 to vector<1x256xf32>
    %404 = arith.mulf %403, %402 : vector<1x256xf32>
    %405 = arith.addf %370, %404 : vector<1x256xf32>
    %c77_126 = arith.constant 77 : index
    %406 = memref.load %arg2[%c77_126] : memref<98xf32, #tpu.memory_space<smem>>
    %c1_127 = arith.constant 1 : index
    %c141_128 = arith.constant 141 : index
    %407 = vector.load %arg6[%c1_127, %c141_128] : memref<2x435xf32, #tpu.memory_space<vmem>>, vector<1x256xf32>
    %408 = vector.broadcast %406 : f32 to vector<1x256xf32>
    %409 = arith.mulf %408, %407 : vector<1x256xf32>
    %410 = arith.addf %375, %409 : vector<1x256xf32>
    %c78_129 = arith.constant 78 : index
    %411 = memref.load %arg2[%c78_129] : memref<98xf32, #tpu.memory_space<smem>>
    %c1_130 = arith.constant 1 : index
    %c142_131 = arith.constant 142 : index
    %412 = vector.load %arg6[%c1_130, %c142_131] : memref<2x435xf32, #tpu.memory_space<vmem>>, vector<1x256xf32>
    %413 = vector.broadcast %411 : f32 to vector<1x256xf32>
    %414 = arith.mulf %413, %412 : vector<1x256xf32>
    %415 = arith.addf %380, %414 : vector<1x256xf32>
    %c79_132 = arith.constant 79 : index
    %416 = memref.load %arg2[%c79_132] : memref<98xf32, #tpu.memory_space<smem>>
    %c1_133 = arith.constant 1 : index
    %c143_134 = arith.constant 143 : index
    %417 = vector.load %arg6[%c1_133, %c143_134] : memref<2x435xf32, #tpu.memory_space<vmem>>, vector<1x256xf32>
    %418 = vector.broadcast %416 : f32 to vector<1x256xf32>
    %419 = arith.mulf %418, %417 : vector<1x256xf32>
    %420 = arith.addf %385, %419 : vector<1x256xf32>
    %c80_135 = arith.constant 80 : index
    %421 = memref.load %arg2[%c80_135] : memref<98xf32, #tpu.memory_space<smem>>
    %c1_136 = arith.constant 1 : index
    %c144_137 = arith.constant 144 : index
    %422 = vector.load %arg6[%c1_136, %c144_137] : memref<2x435xf32, #tpu.memory_space<vmem>>, vector<1x256xf32>
    %423 = vector.broadcast %421 : f32 to vector<1x256xf32>
    %424 = arith.mulf %423, %422 : vector<1x256xf32>
    %425 = arith.addf %390, %424 : vector<1x256xf32>
    %c81_138 = arith.constant 81 : index
    %426 = memref.load %arg2[%c81_138] : memref<98xf32, #tpu.memory_space<smem>>
    %c1_139 = arith.constant 1 : index
    %c145_140 = arith.constant 145 : index
    %427 = vector.load %arg6[%c1_139, %c145_140] : memref<2x435xf32, #tpu.memory_space<vmem>>, vector<1x256xf32>
    %428 = vector.broadcast %426 : f32 to vector<1x256xf32>
    %429 = arith.mulf %428, %427 : vector<1x256xf32>
    %430 = arith.addf %395, %429 : vector<1x256xf32>
    %c82_141 = arith.constant 82 : index
    %431 = memref.load %arg2[%c82_141] : memref<98xf32, #tpu.memory_space<smem>>
    %c1_142 = arith.constant 1 : index
    %c146_143 = arith.constant 146 : index
    %432 = vector.load %arg6[%c1_142, %c146_143] : memref<2x435xf32, #tpu.memory_space<vmem>>, vector<1x256xf32>
    %433 = vector.broadcast %431 : f32 to vector<1x256xf32>
    %434 = arith.mulf %433, %432 : vector<1x256xf32>
    %435 = arith.addf %400, %434 : vector<1x256xf32>
    %c83_144 = arith.constant 83 : index
    %436 = memref.load %arg2[%c83_144] : memref<98xf32, #tpu.memory_space<smem>>
    %c1_145 = arith.constant 1 : index
    %c147_146 = arith.constant 147 : index
    %437 = vector.load %arg6[%c1_145, %c147_146] : memref<2x435xf32, #tpu.memory_space<vmem>>, vector<1x256xf32>
    %438 = vector.broadcast %436 : f32 to vector<1x256xf32>
    %439 = arith.mulf %438, %437 : vector<1x256xf32>
    %440 = arith.addf %405, %439 : vector<1x256xf32>
    %c84 = arith.constant 84 : index
    %441 = memref.load %arg2[%c84] : memref<98xf32, #tpu.memory_space<smem>>
    %c1_147 = arith.constant 1 : index
    %c157_148 = arith.constant 157 : index
    %442 = vector.load %arg6[%c1_147, %c157_148] : memref<2x435xf32, #tpu.memory_space<vmem>>, vector<1x256xf32>
    %443 = vector.broadcast %441 : f32 to vector<1x256xf32>
    %444 = arith.mulf %443, %442 : vector<1x256xf32>
    %445 = arith.addf %410, %444 : vector<1x256xf32>
    %c85 = arith.constant 85 : index
    %446 = memref.load %arg2[%c85] : memref<98xf32, #tpu.memory_space<smem>>
    %c1_149 = arith.constant 1 : index
    %c158_150 = arith.constant 158 : index
    %447 = vector.load %arg6[%c1_149, %c158_150] : memref<2x435xf32, #tpu.memory_space<vmem>>, vector<1x256xf32>
    %448 = vector.broadcast %446 : f32 to vector<1x256xf32>
    %449 = arith.mulf %448, %447 : vector<1x256xf32>
    %450 = arith.addf %415, %449 : vector<1x256xf32>
    %c86 = arith.constant 86 : index
    %451 = memref.load %arg2[%c86] : memref<98xf32, #tpu.memory_space<smem>>
    %c1_151 = arith.constant 1 : index
    %c159_152 = arith.constant 159 : index
    %452 = vector.load %arg6[%c1_151, %c159_152] : memref<2x435xf32, #tpu.memory_space<vmem>>, vector<1x256xf32>
    %453 = vector.broadcast %451 : f32 to vector<1x256xf32>
    %454 = arith.mulf %453, %452 : vector<1x256xf32>
    %455 = arith.addf %420, %454 : vector<1x256xf32>
    %c87 = arith.constant 87 : index
    %456 = memref.load %arg2[%c87] : memref<98xf32, #tpu.memory_space<smem>>
    %c1_153 = arith.constant 1 : index
    %c160_154 = arith.constant 160 : index
    %457 = vector.load %arg6[%c1_153, %c160_154] : memref<2x435xf32, #tpu.memory_space<vmem>>, vector<1x256xf32>
    %458 = vector.broadcast %456 : f32 to vector<1x256xf32>
    %459 = arith.mulf %458, %457 : vector<1x256xf32>
    %460 = arith.addf %425, %459 : vector<1x256xf32>
    %c88 = arith.constant 88 : index
    %461 = memref.load %arg2[%c88] : memref<98xf32, #tpu.memory_space<smem>>
    %c1_155 = arith.constant 1 : index
    %c161_156 = arith.constant 161 : index
    %462 = vector.load %arg6[%c1_155, %c161_156] : memref<2x435xf32, #tpu.memory_space<vmem>>, vector<1x256xf32>
    %463 = vector.broadcast %461 : f32 to vector<1x256xf32>
    %464 = arith.mulf %463, %462 : vector<1x256xf32>
    %465 = arith.addf %430, %464 : vector<1x256xf32>
    %c89 = arith.constant 89 : index
    %466 = memref.load %arg2[%c89] : memref<98xf32, #tpu.memory_space<smem>>
    %c1_157 = arith.constant 1 : index
    %c162_158 = arith.constant 162 : index
    %467 = vector.load %arg6[%c1_157, %c162_158] : memref<2x435xf32, #tpu.memory_space<vmem>>, vector<1x256xf32>
    %468 = vector.broadcast %466 : f32 to vector<1x256xf32>
    %469 = arith.mulf %468, %467 : vector<1x256xf32>
    %470 = arith.addf %435, %469 : vector<1x256xf32>
    %c90 = arith.constant 90 : index
    %471 = memref.load %arg2[%c90] : memref<98xf32, #tpu.memory_space<smem>>
    %c1_159 = arith.constant 1 : index
    %c163_160 = arith.constant 163 : index
    %472 = vector.load %arg6[%c1_159, %c163_160] : memref<2x435xf32, #tpu.memory_space<vmem>>, vector<1x256xf32>
    %473 = vector.broadcast %471 : f32 to vector<1x256xf32>
    %474 = arith.mulf %473, %472 : vector<1x256xf32>
    %475 = arith.addf %440, %474 : vector<1x256xf32>
    %c91 = arith.constant 91 : index
    %476 = memref.load %arg2[%c91] : memref<98xf32, #tpu.memory_space<smem>>
    %c1_161 = arith.constant 1 : index
    %c173_162 = arith.constant 173 : index
    %477 = vector.load %arg6[%c1_161, %c173_162] : memref<2x435xf32, #tpu.memory_space<vmem>>, vector<1x256xf32>
    %478 = vector.broadcast %476 : f32 to vector<1x256xf32>
    %479 = arith.mulf %478, %477 : vector<1x256xf32>
    %480 = arith.addf %445, %479 : vector<1x256xf32>
    %c92 = arith.constant 92 : index
    %481 = memref.load %arg2[%c92] : memref<98xf32, #tpu.memory_space<smem>>
    %c1_163 = arith.constant 1 : index
    %c174_164 = arith.constant 174 : index
    %482 = vector.load %arg6[%c1_163, %c174_164] : memref<2x435xf32, #tpu.memory_space<vmem>>, vector<1x256xf32>
    %483 = vector.broadcast %481 : f32 to vector<1x256xf32>
    %484 = arith.mulf %483, %482 : vector<1x256xf32>
    %485 = arith.addf %450, %484 : vector<1x256xf32>
    %c93_165 = arith.constant 93 : index
    %486 = memref.load %arg2[%c93_165] : memref<98xf32, #tpu.memory_space<smem>>
    %c1_166 = arith.constant 1 : index
    %c175_167 = arith.constant 175 : index
    %487 = vector.load %arg6[%c1_166, %c175_167] : memref<2x435xf32, #tpu.memory_space<vmem>>, vector<1x256xf32>
    %488 = vector.broadcast %486 : f32 to vector<1x256xf32>
    %489 = arith.mulf %488, %487 : vector<1x256xf32>
    %490 = arith.addf %455, %489 : vector<1x256xf32>
    %c94_168 = arith.constant 94 : index
    %491 = memref.load %arg2[%c94_168] : memref<98xf32, #tpu.memory_space<smem>>
    %c1_169 = arith.constant 1 : index
    %c176_170 = arith.constant 176 : index
    %492 = vector.load %arg6[%c1_169, %c176_170] : memref<2x435xf32, #tpu.memory_space<vmem>>, vector<1x256xf32>
    %493 = vector.broadcast %491 : f32 to vector<1x256xf32>
    %494 = arith.mulf %493, %492 : vector<1x256xf32>
    %495 = arith.addf %460, %494 : vector<1x256xf32>
    %c95_171 = arith.constant 95 : index
    %496 = memref.load %arg2[%c95_171] : memref<98xf32, #tpu.memory_space<smem>>
    %c1_172 = arith.constant 1 : index
    %c177_173 = arith.constant 177 : index
    %497 = vector.load %arg6[%c1_172, %c177_173] : memref<2x435xf32, #tpu.memory_space<vmem>>, vector<1x256xf32>
    %498 = vector.broadcast %496 : f32 to vector<1x256xf32>
    %499 = arith.mulf %498, %497 : vector<1x256xf32>
    %500 = arith.addf %465, %499 : vector<1x256xf32>
    %c96_174 = arith.constant 96 : index
    %501 = memref.load %arg2[%c96_174] : memref<98xf32, #tpu.memory_space<smem>>
    %c1_175 = arith.constant 1 : index
    %c178_176 = arith.constant 178 : index
    %502 = vector.load %arg6[%c1_175, %c178_176] : memref<2x435xf32, #tpu.memory_space<vmem>>, vector<1x256xf32>
    %503 = vector.broadcast %501 : f32 to vector<1x256xf32>
    %504 = arith.mulf %503, %502 : vector<1x256xf32>
    %505 = arith.addf %470, %504 : vector<1x256xf32>
    %c97_177 = arith.constant 97 : index
    %506 = memref.load %arg2[%c97_177] : memref<98xf32, #tpu.memory_space<smem>>
    %c1_178 = arith.constant 1 : index
    %c179_179 = arith.constant 179 : index
    %507 = vector.load %arg6[%c1_178, %c179_179] : memref<2x435xf32, #tpu.memory_space<vmem>>, vector<1x256xf32>
    %508 = vector.broadcast %506 : f32 to vector<1x256xf32>
    %509 = arith.mulf %508, %507 : vector<1x256xf32>
    %510 = arith.addf %475, %509 : vector<1x256xf32>
    %c0_180 = arith.constant 0 : index
    %c0_181 = arith.constant 0 : index
    %511 = vector.load %arg4[%c0_180, %c0_181] : memref<7x256xf32, #tpu.memory_space<vmem>>, vector<1x256xf32>
    %512 = arith.mulf %480, %511 : vector<1x256xf32>
    %c1_182 = arith.constant 1 : index
    %c0_183 = arith.constant 0 : index
    %513 = vector.load %arg4[%c1_182, %c0_183] : memref<7x256xf32, #tpu.memory_space<vmem>>, vector<1x256xf32>
    %514 = arith.mulf %485, %513 : vector<1x256xf32>
    %515 = arith.addf %512, %514 : vector<1x256xf32>
    %c2_184 = arith.constant 2 : index
    %c0_185 = arith.constant 0 : index
    %516 = vector.load %arg4[%c2_184, %c0_185] : memref<7x256xf32, #tpu.memory_space<vmem>>, vector<1x256xf32>
    %517 = arith.mulf %490, %516 : vector<1x256xf32>
    %518 = arith.addf %515, %517 : vector<1x256xf32>
    %c3_186 = arith.constant 3 : index
    %c0_187 = arith.constant 0 : index
    %519 = vector.load %arg4[%c3_186, %c0_187] : memref<7x256xf32, #tpu.memory_space<vmem>>, vector<1x256xf32>
    %520 = arith.mulf %495, %519 : vector<1x256xf32>
    %521 = arith.addf %518, %520 : vector<1x256xf32>
    %c4_188 = arith.constant 4 : index
    %c0_189 = arith.constant 0 : index
    %522 = vector.load %arg4[%c4_188, %c0_189] : memref<7x256xf32, #tpu.memory_space<vmem>>, vector<1x256xf32>
    %523 = arith.mulf %500, %522 : vector<1x256xf32>
    %524 = arith.addf %521, %523 : vector<1x256xf32>
    %c5_190 = arith.constant 5 : index
    %c0_191 = arith.constant 0 : index
    %525 = vector.load %arg4[%c5_190, %c0_191] : memref<7x256xf32, #tpu.memory_space<vmem>>, vector<1x256xf32>
    %526 = arith.mulf %505, %525 : vector<1x256xf32>
    %527 = arith.addf %524, %526 : vector<1x256xf32>
    %c6_192 = arith.constant 6 : index
    %c0_193 = arith.constant 0 : index
    %528 = vector.load %arg4[%c6_192, %c0_193] : memref<7x256xf32, #tpu.memory_space<vmem>>, vector<1x256xf32>
    %529 = arith.mulf %510, %528 : vector<1x256xf32>
    %530 = arith.addf %527, %529 : vector<1x256xf32>
    %c0_194 = arith.constant 0 : index
    %531 = memref.load %arg3[%c0_194] : memref<2xf32, #tpu.memory_space<smem>>
    %532 = vector.broadcast %531 : f32 to vector<1x256xf32>
    %533 = arith.mulf %530, %532 : vector<1x256xf32>
    %c1_195 = arith.constant 1 : index
    %534 = memref.load %arg3[%c1_195] : memref<2xf32, #tpu.memory_space<smem>>
    %535 = vector.broadcast %534 : f32 to vector<1x256xf32>
    %536 = arith.addf %533, %535 : vector<1x256xf32>
    %537 = arith.negf %536 : vector<1x256xf32>
    %538 = math.exp %537 : vector<1x256xf32>
    %cst_196 = arith.constant 1.000000e+00 : f32
    %539 = vector.broadcast %cst_196 : f32 to vector<1x256xf32>
    %540 = arith.addf %539, %538 : vector<1x256xf32>
    %541 = arith.divf %539, %540 : vector<1x256xf32>
    %542 = vector.broadcast %541 : vector<1x256xf32> to vector<4x256xf32>
    %543 = arith.mulf %1, %542 : vector<4x256xf32>
    %c0_197 = arith.constant 0 : index
    %c0_198 = arith.constant 0 : index
    %c0_199 = arith.constant 0 : index
    %544 = vector.load %arg5[%c0_197, %c0_198, %c0_199] : memref<1x4x256xf32, #tpu.memory_space<vmem>>, vector<1x4x256xf32>
    %545 = vector.shape_cast %544 : vector<1x4x256xf32> to vector<4x256xf32>
    %546 = vector.shape_cast %543 : vector<4x256xf32> to vector<1x4x256xf32>
    tpu.vector_store %arg5[%c0_197, %c0_198, %c0_199], %546 {strides = array<i32>} : memref<1x4x256xf32, #tpu.memory_space<vmem>>, vector<1x4x256xf32>,
    return
  }
  func.func @transform_0(%arg0: i32) -> (i32, i32, i32) {
    %c0_i32 = arith.constant 0 : i32
    %c0_i32_0 = arith.constant 0 : i32
    %c0_i32_1 = arith.constant 0 : i32
    return %arg0, %c0_i32, %c0_i32_0 : i32, i32, i32
  }
  func.func @transform_1(%arg0: i32) -> i32 {
    %c0_i32 = arith.constant 0 : i32
    %c0_i32_0 = arith.constant 0 : i32
    return %c0_i32 : i32
  }
  func.func @transform_2(%arg0: i32) -> i32 {
    %c0_i32 = arith.constant 0 : i32
    %c0_i32_0 = arith.constant 0 : i32
    return %c0_i32 : i32
  }
  func.func @transform_3(%arg0: i32) -> (i32, i32) {
    %c0_i32 = arith.constant 0 : i32
    %c0_i32_0 = arith.constant 0 : i32
    %c0_i32_1 = arith.constant 0 : i32
    return %c0_i32, %c0_i32_0 : i32, i32
  }
  func.func @transform_4(%arg0: i32) -> (i32, i32, i32) {
    %c0_i32 = arith.constant 0 : i32
    %c0_i32_0 = arith.constant 0 : i32
    %c0_i32_1 = arith.constant 0 : i32
    return %arg0, %c0_i32, %c0_i32_0 : i32, i32, i32
  }
}

</mosaic_0001>

<llo_original>
// kernel: tpu_custom_call.1
$region0: #{tpu_custom_call.1}
  #allocation0 [shape = 'u32[]', space=smem, size = 0x4, offset = 0x4, fixed_abs, tag = 'smem constant byte address 0x4 - core index']
  #allocation1 [shape = 'u32[144,128]{1,0:T(1,128)}', space=vmem, size = 0x12000, scoped, tag = 'internal scratch']
  #allocation2 [shape = 'f32[2,435]{1,0:T(2,128)}', space=vmem, size = 0x1000, scoped, tag = 'scratch operand']
  %s0 = inlined_call_operand.hbm [shape: f32[2,4,256], index: 0, kind: input, shape index: {}]
  %s1 = inlined_call_operand.vmem [shape: f32[98], index: 1, kind: input, shape index: {}]
  %s2 = inlined_call_operand.vmem [shape: f32[2], index: 2, kind: input, shape index: {}]
  %s3 = inlined_call_operand.hbm [shape: f32[7,256], index: 3, kind: input, shape index: {}]
  %s4 = inlined_call_operand.hbm [shape: f32[2,4,256], index: 4, kind: output, shape index: {}]
  %s5 = sld [smem:[#allocation0]]
  $region65: #{tpu_custom_call.1} parent=0
    _
  %s7 = ssub.s32 1, %s5
  %s8 = scalar_select 0, %s7, %s5
  $region1: #{tpu_custom_call.1} parent=0
    #allocation3 [shape = 'u8[8192]{0}', space=vmem, size = 0x2000, scoped, tag = 'input window, operand 0']
    #allocation4 [shape = 's32[2]{0}', space=sflag, size = 0x8, scoped, tag = 'scoped memory for tpu_custom_call.1']
    #allocation5 [shape = 's32[2]{0}', space=sflag, size = 0x8, scoped, tag = 'scoped memory for tpu_custom_call.1']
    #allocation6 [shape = 's32[2]{0}', space=sflag, size = 0x8, scoped, tag = 'scoped memory for tpu_custom_call.1']
    #allocation7 [shape = 'u8[512]{0}', space=smem, size = 0x200, scoped, tag = 'input window, operand 1, single buffered']
    #allocation8 [shape = 'u8[512]{0}', space=smem, size = 0x200, scoped, tag = 'input window, operand 2, single buffered']
    #allocation9 [shape = 's32[1]{0}', space=sflag, size = 0x4, scoped, tag = 'scoped memory for tpu_custom_call.1']
    #allocation10 [shape = 'u8[8192]{0}', space=vmem, size = 0x2000, scoped, tag = 'input window, operand 3, single buffered']
    #allocation11 [shape = 's32[1]{0}', space=sflag, size = 0x4, scoped, tag = 'scoped memory for tpu_custom_call.1']
    #allocation12 [shape = 'u8[8192]{0}', space=vmem, size = 0x2000, scoped, tag = 'output window, operand 0']
    %9 = vsyncpa [#allocation4], 0
    %s10 = scalar_lea.sflag [#allocation4], 1
    %11 = vsyncpa %s10, 0
    %12 = vsyncpa [#allocation6], 0
    %13 = vsyncpa [#allocation9], 0
    %14 = vsyncpa [#allocation11], 0
    %15 = vsyncpa [#allocation5], 0
    %s16 = scalar_lea.sflag [#allocation5], 1
    %17 = vsyncpa %s16, 0
    loop: start=0, step=1, limit=4
    $region2: #{tpu_custom_call.1} parent=1 // loop_pre_header
      _
    $region3: #{tpu_custom_call.1} parent=1 // loop_header
      %s19 = sphi 0, %s23
      %p20 = scmp.ge.s32.totalorder %s19, 4
      %s29 = sphi 0, %s31
      %s32 = sphi 0, %s29
      %s33 = sphi 0, %s32
      %s49 = sphi 0, %s33
      %s53 = sphi 0, %s53
      %s55 = sphi 0, %s53
      %s56 = sphi 0, %s55
      %s70 = sphi 0, %s56
      %s74 = sphi 0, %s74
      %s76 = sphi 0, %s74
      %s77 = sphi 0, %s76
      %s91 = sphi 0, %s77
      %s95 = sphi 0, %s95
      %s97 = sphi 0, %s95
      %s98 = sphi 0, %s97
      %s112 = sphi 0, %s98
      %s118 = sphi 0, %s120
      %s121 = sphi 0, %s118
      %s122 = sphi 0, %s121
      %s138 = sphi 0, %s122
    $region4: #{tpu_custom_call.1} parent=1 // loop_header_branch
      %22 = sbr.rel (%p20) target = $region8
    $region5: #{tpu_custom_call.1} parent=1 // loop_body
      %s24 = ssub.s32 %s19, 1
      %s25 = ssub.s32 %s19, 2
      %s26 = sadd.s32 %s19, 1
      %s27 = ssub.s32 %s19, %s26
      %p28 = scmp.eq.s32.totalorder %s27, 0
      %s30 = sadd.s32 %s29, 1
      %s31 = scalar_select %p28, %s29, %s30
      %p34 = pneg %p28
      %p35 = scmp.eq.s32.totalorder %s19, 1
      %p36 = por %p34, %p35
      %p37 = scmp.ne.s32.totalorder %s29, %s32
      %p38 = scmp.eq.s32.totalorder %s19, 0
      %p39 = por %p37, %p38
      %p40 = scmp.ne.s32.totalorder %s29, %s32
      %p41 = scmp.eq.s32.totalorder %s24, 1
      %p42 = por %p40, %p41
      %p43 = scmp.ne.s32.totalorder %s32, %s33
      %p44 = scmp.eq.s32.totalorder %s24, 0
      %p45 = por %p43, %p44
      %p46 = scmp.ne.s32.totalorder %s32, %s33
      %p47 = scmp.eq.s32.totalorder %s25, 1
      %p48 = por %p46, %p47
      %p50 = scmp.ne.s32.totalorder %s33, %s49
      %p51 = scmp.eq.s32.totalorder %s25, 0
      %p52 = por %p50, %p51
      %s54 = sadd.s32 %s53, 1
      %p57 = scmp.eq.s32.totalorder %s19, 1
      %p58 = scmp.ne.s32.totalorder %s53, %s55
      %p59 = scmp.eq.s32.totalorder %s19, 0
      %p60 = por %p58, %p59
      %p61 = scmp.ne.s32.totalorder %s53, %s55
      %p62 = scmp.eq.s32.totalorder %s24, 1
      %p63 = por %p61, %p62
      %p64 = scmp.ne.s32.totalorder %s55, %s56
      %p65 = scmp.eq.s32.totalorder %s24, 0
      %p66 = por %p64, %p65
      %p67 = scmp.ne.s32.totalorder %s55, %s56
      %p68 = scmp.eq.s32.totalorder %s25, 1
      %p69 = por %p67, %p68
      %p71 = scmp.ne.s32.totalorder %s56, %s70
      %p72 = scmp.eq.s32.totalorder %s25, 0
      %p73 = por %p71, %p72
      %s75 = sadd.s32 %s74, 1
      %p78 = scmp.eq.s32.totalorder %s19, 1
      %p79 = scmp.ne.s32.totalorder %s74, %s76
      %p80 = scmp.eq.s32.totalorder %s19, 0
      %p81 = por %p79, %p80
      %p82 = scmp.ne.s32.totalorder %s74, %s76
      %p83 = scmp.eq.s32.totalorder %s24, 1
      %p84 = por %p82, %p83
      %p85 = scmp.ne.s32.totalorder %s76, %s77
      %p86 = scmp.eq.s32.totalorder %s24, 0
      %p87 = por %p85, %p86
      %p88 = scmp.ne.s32.totalorder %s76, %s77
      %p89 = scmp.eq.s32.totalorder %s25, 1
      %p90 = por %p88, %p89
      %p92 = scmp.ne.s32.totalorder %s77, %s91
      %p93 = scmp.eq.s32.totalorder %s25, 0
      %p94 = por %p92, %p93
      %s96 = sadd.s32 %s95, 1
      %p99 = scmp.eq.s32.totalorder %s19, 1
      %p100 = scmp.ne.s32.totalorder %s95, %s97
      %p101 = scmp.eq.s32.totalorder %s19, 0
      %p102 = por %p100, %p101
      %p103 = scmp.ne.s32.totalorder %s95, %s97
      %p104 = scmp.eq.s32.totalorder %s24, 1
      %p105 = por %p103, %p104
      %p106 = scmp.ne.s32.totalorder %s97, %s98
      %p107 = scmp.eq.s32.totalorder %s24, 0
      %p108 = por %p106, %p107
      %p109 = scmp.ne.s32.totalorder %s97, %s98
      %p110 = scmp.eq.s32.totalorder %s25, 1
      %p111 = por %p109, %p110
      %p113 = scmp.ne.s32.totalorder %s98, %s112
      %p114 = scmp.eq.s32.totalorder %s25, 0
      %p115 = por %p113, %p114
      %s116 = ssub.s32 %s19, %s26
      %p117 = scmp.eq.s32.totalorder %s116, 0
      %s119 = sadd.s32 %s118, 1
      %s120 = scalar_select %p117, %s118, %s119
      %p123 = pneg %p117
      %p124 = scmp.eq.s32.totalorder %s19, 1
      %p125 = por %p123, %p124
      %p126 = scmp.ne.s32.totalorder %s118, %s121
      %p127 = scmp.eq.s32.totalorder %s19, 0
      %p128 = por %p126, %p127
      %p129 = scmp.ne.s32.totalorder %s118, %s121
      %p130 = scmp.eq.s32.totalorder %s24, 1
      %p131 = por %p129, %p130
      %p132 = scmp.ne.s32.totalorder %s121, %s122
      %p133 = scmp.eq.s32.totalorder %s24, 0
      %p134 = por %p132, %p133
      %p135 = scmp.ne.s32.totalorder %s121, %s122
      %p136 = scmp.eq.s32.totalorder %s25, 1
      %p137 = por %p135, %p136
      %p139 = scmp.ne.s32.totalorder %s122, %s138
      %p140 = scmp.eq.s32.totalorder %s25, 0
      %p141 = por %p139, %p140
      %p142 = scmp.le.s32.totalorder 1, %s19
      %p143 = scmp.lt.s32.totalorder %s19, 3
      %p144 = pnand %p142, %p143
      %p145 = pneg %p144
      // Predicated region
      $region9: #{tpu_custom_call.1} parent=5 // pred_check
        _
      $region10: #{tpu_custom_call.1} parent=5 // pred_check_branch
        %147 = sbr.rel (%p144) target = $region12
      $region11: #{tpu_custom_call.1} parent=5 // pred_region
        %s148 = ssub.s32 %s19, 1
        // Predicated region
        $region13: #{tpu_custom_call.1} parent=11 // pred_check
          %p149 = pneg %p66
        $region14: #{tpu_custom_call.1} parent=11 // pred_check_branch
          %151 = sbr.rel (%p149) target = $region16
        $region15: #{tpu_custom_call.1} parent=11 // pred_region
          %s153 = ssub.s32 16, 16
          %154 = vsyncadd [#allocation6], %s153
          %s156 = sshll.u32 %s1, 4
          %s157 = int_to_ptr.vmem [resolvable:$true] %s156
          %159 = dma.vmem_to_smem %s157, 16, [#allocation7], [#allocation6]
        $region16: #{tpu_custom_call.1} parent=11 // pred_fallthru
          _
        // Predicated region
        $region17: #{tpu_custom_call.1} parent=11 // pred_check
          %p160 = pneg %p87
        $region18: #{tpu_custom_call.1} parent=11 // pred_check_branch
          %162 = sbr.rel (%p160) target = $region20
        $region19: #{tpu_custom_call.1} parent=11 // pred_region
          %s164 = ssub.s32 16, 16
          %165 = vsyncadd [#allocation9], %s164
          %s167 = sshll.u32 %s2, 4
          %s168 = int_to_ptr.vmem [resolvable:$true] %s167
          %170 = dma.vmem_to_smem %s168, 16, [#allocation8], [#allocation9]
        $region20: #{tpu_custom_call.1} parent=11 // pred_fallthru
          _
        // Predicated region
        $region21: #{tpu_custom_call.1} parent=11 // pred_check
          %p171 = pneg %p108
        $region22: #{tpu_custom_call.1} parent=11 // pred_check_branch
          %173 = sbr.rel (%p171) target = $region24
        $region23: #{tpu_custom_call.1} parent=11 // pred_region
          %s175 = ssub.s32 256, 256
          %176 = vsyncadd [#allocation11], %s175
          %s178 = sshll.u32 [#allocation10], 4
          %s179 = int_to_ptr.vmem [resolvable:$true] %s178
          %181 = dma.hbm_to_vmem [thread:$0]  %s3, 256, %s179, [#allocation11]
        $region24: #{tpu_custom_call.1} parent=11 // pred_fallthru
          _
      $region12: #{tpu_custom_call.1} parent=5 // pred_fallthru
        _
      %p182 = scmp.lt.s32.totalorder %s19, 2
      // Predicated region
      $region25: #{tpu_custom_call.1} parent=5 // pred_check
        %p183 = pneg %p182
      $region26: #{tpu_custom_call.1} parent=5 // pred_check_branch
        %185 = sbr.rel (%p183) target = $region28
      $region27: #{tpu_custom_call.1} parent=5 // pred_region
        // Predicated region
        $region29: #{tpu_custom_call.1} parent=27 // pred_check
          %p186 = pneg %p39
        $region30: #{tpu_custom_call.1} parent=27 // pred_check_branch
          %188 = sbr.rel (%p186) target = $region32
        $region31: #{tpu_custom_call.1} parent=27 // pred_region
          %s189 = sand.u32 %s29, 1
          %s190 = scalar_lea.sflag [#allocation4], %s189
          %s191 = sand.u32 %s29, 1
          %s192 = smul.addr %s191, 8
          %s193 = scalar_lea.vmem [#allocation3], %s192
          %s195 = ssub.s32 128, 128
          %196 = vsyncadd %s190, %s195
          %s197 = smul.addr %s19, 2
          %s198 = smul.addr %s197, 64
          %s199 = scalar_lea.hbm %s0, %s198
          %s201 = sshll.u32 %s193, 4
          %s202 = int_to_ptr.vmem [resolvable:$true] %s201
          %204 = dma.hbm_to_vmem [thread:$0]  %s199, 128, %s202, %s190
        $region32: #{tpu_custom_call.1} parent=27 // pred_fallthru
          _
      $region28: #{tpu_custom_call.1} parent=5 // pred_fallthru
        _
      %p205 = scmp.le.s32.totalorder 1, %s19
      %p206 = scmp.lt.s32.totalorder %s19, 3
      %p207 = pnand %p205, %p206
      %p208 = pneg %p207
      // Predicated region
      $region33: #{tpu_custom_call.1} parent=5 // pred_check
        _
      $region34: #{tpu_custom_call.1} parent=5 // pred_check_branch
        %210 = sbr.rel (%p207) target = $region36
      $region35: #{tpu_custom_call.1} parent=5 // pred_region
        %s211 = ssub.s32 %s19, 1
        %s212 = sand.u32 %s32, 1
        %s213 = scalar_lea.sflag [#allocation4], %s212
        %s214 = sand.u32 %s32, 1
        %s215 = smul.addr %s214, 8
        %s216 = scalar_lea.vmem [#allocation3], %s215
        // Predicated region
        $region37: #{tpu_custom_call.1} parent=35 // pred_check
          %p217 = pneg %p45
        $region38: #{tpu_custom_call.1} parent=35 // pred_check_branch
          %219 = sbr.rel (%p217) target = $region40
        $region39: #{tpu_custom_call.1} parent=35 // pred_region
          %220 = dma.done %s213, 128
        $region40: #{tpu_custom_call.1} parent=35 // pred_fallthru
          _
        // Predicated region
        $region41: #{tpu_custom_call.1} parent=35 // pred_check
          %p221 = pneg %p66
        $region42: #{tpu_custom_call.1} parent=35 // pred_check_branch
          %223 = sbr.rel (%p221) target = $region44
        $region43: #{tpu_custom_call.1} parent=35 // pred_region
          %224 = dma.done [#allocation6], 16
        $region44: #{tpu_custom_call.1} parent=35 // pred_fallthru
          _
        // Predicated region
        $region45: #{tpu_custom_call.1} parent=35 // pred_check
          %p225 = pneg %p87
        $region46: #{tpu_custom_call.1} parent=35 // pred_check_branch
          %227 = sbr.rel (%p225) target = $region48
        $region47: #{tpu_custom_call.1} parent=35 // pred_region
          %228 = dma.done [#allocation9], 16
        $region48: #{tpu_custom_call.1} parent=35 // pred_fallthru
          _
        // Predicated region
        $region49: #{tpu_custom_call.1} parent=35 // pred_check
          %p229 = pneg %p108
        $region50: #{tpu_custom_call.1} parent=35 // pred_check_branch
          %231 = sbr.rel (%p229) target = $region52
        $region51: #{tpu_custom_call.1} parent=35 // pred_region
          %232 = dma.done [#allocation11], 256
        $region52: #{tpu_custom_call.1} parent=35 // pred_fallthru
          _
        %233 = sfence
        %s234 = sand.u32 %s32, 1
        %s235 = scalar_lea.sflag [#allocation4], %s234
        %s236 = sand.u32 %s32, 1
        %s237 = smul.addr %s236, 8
        %s238 = scalar_lea.vmem [#allocation3], %s237
        %p239 = pneg %p45
        %p240 = pneg %p42
        %p241 = pneg %p66
        %p242 = pneg %p63
        %p243 = pneg %p87
        %p244 = pneg %p84
        %p245 = pneg %p108
        %p246 = pneg %p105
        %p247 = pneg %p134
        %p248 = pneg %p131
        %s249 = sand.u32 %s121, 1
        %s250 = scalar_lea.sflag [#allocation5], %s249
        %s251 = sand.u32 %s121, 1
        %s252 = smul.addr %s251, 8
        %s253 = scalar_lea.vmem [#allocation12], %s252
        %v254 = vld [vmem:[%s216] sm:$0xff]
        %v256 = vcombine.high %v254, %v254
        %vm258 = vcmask 1043456
        %v259 = vsel %vm258, %v254, -inf
        %v260 = vrot.slane %v259, 4
        %v261 = vmax.f32 %v259, %v260
        %v262 = vrot.slane %v261, 2
        %v263 = vmax.f32 %v261, %v262
        %v264 = vrot.slane %v263, 1
        %v265 = vmax.f32 %v263, %v264
        %v266 = vsel %vm258, %v256, -inf
        %v267 = vrot.slane %v266, 4
        %v268 = vmax.f32 %v266, %v267
        %v269 = vrot.slane %v268, 2
        %v270 = vmax.f32 %v268, %v269
        %v271 = vrot.slane %v270, 1
        %v272 = vmax.f32 %v270, %v271
        %v273 = vsel %vm258, %v254, 0.0
        %v274 = vrot.slane %v273, 4
        %v275 = vadd.f32 %v273, %v274
        %v276 = vrot.slane %v275, 2
        %v277 = vadd.f32 %v275, %v276
        %v278 = vrot.slane %v277, 1
        %v279 = vadd.f32 %v277, %v278
        %v280 = vsel %vm258, %v256, 0.0
        %v281 = vrot.slane %v280, 4
        %v282 = vadd.f32 %v280, %v281
        %v283 = vrot.slane %v282, 2
        %v284 = vadd.f32 %v282, %v283
        %v285 = vrot.slane %v284, 1
        %v286 = vadd.f32 %v284, %v285
        %v287 = vmul.f32 %v279, 0.25
        %v288 = vmul.f32 %v286, 0.25
        %289 = vst [vmem:[#allocation2] sm:$0x3] 0.0
        %vm290 = vcmask 410624
        %291 = vst.msk [vmem:[#allocation2 + $0x6] sm:$0x3] %vm290, 0.0
        %v294 = vcombine.low %v265, %v272
        %v296 = vunpack.c.l.s4 1966171168
        %v297 = vunpack.c.0.s8 %v296
        %v298 = vlaneseq
        %v299 = vshrl.u32 %v298, 7
        %v300 = vsub.s32 %v297, %v299
        %v301 = vrot.slane %v294, %v300
        %v303 = vunpack.c.l.s4 1966171168
        %v304 = vunpack.c.0.s8 %v303
        %v305 = vlaneseq
        %v306 = vshrl.u32 %v305, 7
        %v307 = vsub.s32 %v304, %v306
        %v308 = vrot.slane %v301, %v307
        %v310 = vlaneseq
        %vm311 = vcmp.ge.s32.totalorder %v310, 0
        %vm312 = vcmp.lt.s32.totalorder %v310, 256
        %vm313 = vmand %vm311, %vm312
        %s314 = scalar_lea.vmem [#allocation2], 2
        %315 = vst.msk [vmem:[%s314] ss:$2 sm:$0x3] %vm313, %v308
        %v318 = vcombine.low %v287, %v288
        %v320 = vunpack.c.l.s4 1966171168
        %v321 = vunpack.c.0.s8 %v320
        %v322 = vlaneseq
        %v323 = vshrl.u32 %v322, 7
        %v324 = vsub.s32 %v321, %v323
        %v325 = vrot.slane %v318, %v324
        %v327 = vunpack.c.l.s4 1966171168
        %v328 = vunpack.c.0.s8 %v327
        %v329 = vlaneseq
        %v330 = vshrl.u32 %v329, 7
        %v331 = vsub.s32 %v328, %v330
        %v332 = vrot.slane %v325, %v331
        %s334 = scalar_lea.vmem [#allocation2], 3
        %335 = vst.msk [vmem:[%s334] ss:$2 sm:$0x3] %vm313, %v332
        %s336 = sld [smem:[#allocation7]]
        %v337 = vld [vmem:[#allocation2] ss:$2 sm:$0x7]
        %v338 = vstv %s336
        %v339 = vmul.f32 %v338, %v337
        %v340 = vadd.f32 %v339, 0.0
        %s341 = sld [smem:[#allocation7 + $0x1]]
        %v342 = vstv %s341
        %v343 = vmul.f32 %v342, %v337
        %v344 = vadd.f32 %v343, 0.0
        %s345 = sld [smem:[#allocation7 + $0x2]]
        %v346 = vstv %s345
        %v347 = vmul.f32 %v346, %v337
        %v348 = vadd.f32 %v347, 0.0
        %s349 = sld [smem:[#allocation7 + $0x3]]
        %v350 = vstv %s349
        %v351 = vmul.f32 %v350, %v337
        %v352 = vadd.f32 %v351, 0.0
        %s353 = sld [smem:[#allocation7 + $0x4]]
        %v354 = vstv %s353
        %v355 = vmul.f32 %v354, %v337
        %v356 = vadd.f32 %v355, 0.0
        %s357 = sld [smem:[#allocation7 + $0x5]]
        %v358 = vstv %s357
        %v359 = vmul.f32 %v358, %v337
        %v360 = vadd.f32 %v359, 0.0
        %s361 = sld [smem:[#allocation7 + $0x6]]
        %v362 = vstv %s361
        %v363 = vmul.f32 %v362, %v337
        %v364 = vadd.f32 %v363, 0.0
        %s365 = sld [smem:[#allocation7 + $0x7]]
        %v366 = vstv %s365
        %v367 = vmul.f32 %v366, %v337
        %369 = vrot.lane.b32.xlu0 %v367, 112
        %v370 = vpop.permute.xlu0 %369
        %v371 = vrot.slane %v370, 1
        %vm372 = vcmask 916480
        %v373 = vsel %vm372, %v370, %v371
        %v375 = vadd.f32 %v340, %v373
        %s376 = sld [smem:[#allocation7 + $0x8]]
        %v377 = vstv %s376
        %v378 = vmul.f32 %v377, %v337
        %380 = vrot.lane.b32.xlu0 %v378, 112
        %v381 = vpop.permute.xlu0 %380
        %v382 = vrot.slane %v381, 1
        %v383 = vsel %vm372, %v381, %v382
        %v385 = vadd.f32 %v344, %v383
        %s386 = sld [smem:[#allocation7 + $0x9]]
        %v387 = vstv %s386
        %v388 = vmul.f32 %v387, %v337
        %390 = vrot.lane.b32.xlu0 %v388, 112
        %v391 = vpop.permute.xlu0 %390
        %v392 = vrot.slane %v391, 1
        %v393 = vsel %vm372, %v391, %v392
        %v395 = vadd.f32 %v348, %v393
        %s396 = sld [smem:[#allocation7 + $0xa]]
        %v397 = vstv %s396
        %v398 = vmul.f32 %v397, %v337
        %400 = vrot.lane.b32.xlu0 %v398, 112
        %v401 = vpop.permute.xlu0 %400
        %v402 = vrot.slane %v401, 1
        %v403 = vsel %vm372, %v401, %v402
        %v405 = vadd.f32 %v352, %v403
        %s406 = sld [smem:[#allocation7 + $0xb]]
        %v407 = vstv %s406
        %v408 = vmul.f32 %v407, %v337
        %410 = vrot.lane.b32.xlu0 %v408, 112
        %v411 = vpop.permute.xlu0 %410
        %v412 = vrot.slane %v411, 1
        %v413 = vsel %vm372, %v411, %v412
        %v415 = vadd.f32 %v356, %v413
        %s416 = sld [smem:[#allocation7 + $0xc]]
        %v417 = vstv %s416
        %v418 = vmul.f32 %v417, %v337
        %420 = vrot.lane.b32.xlu0 %v418, 112
        %v421 = vpop.permute.xlu0 %420
        %v422 = vrot.slane %v421, 1
        %v423 = vsel %vm372, %v421, %v422
        %v425 = vadd.f32 %v360, %v423
        %s426 = sld [smem:[#allocation7 + $0xd]]
        %v427 = vstv %s426
        %v428 = vmul.f32 %v427, %v337
        %430 = vrot.lane.b32.xlu0 %v428, 112
        %v431 = vpop.permute.xlu0 %430
        %v432 = vrot.slane %v431, 1
        %v433 = vsel %vm372, %v431, %v432
        %v435 = vadd.f32 %v364, %v433
        %s436 = sld [smem:[#allocation7 + $0xe]]
        %v437 = vstv %s436
        %v438 = vmul.f32 %v437, %v337
        %440 = vrot.lane.b32.xlu0 %v438, 96
        %v441 = vpop.permute.xlu0 %440
        %v442 = vrot.slane %v441, 1
        %vm443 = vcmask 785408
        %v444 = vsel %vm443, %v441, %v442
        %v446 = vadd.f32 %v375, %v444
        %s447 = sld [smem:[#allocation7 + $0xf]]
        %v448 = vstv %s447
        %v449 = vmul.f32 %v448, %v337
        %451 = vrot.lane.b32.xlu0 %v449, 96
        %v452 = vpop.permute.xlu0 %451
        %v453 = vrot.slane %v452, 1
        %v454 = vsel %vm443, %v452, %v453
        %v456 = vadd.f32 %v385, %v454
        %s457 = sld [smem:[#allocation7 + $0x10]]
        %v458 = vstv %s457
        %v459 = vmul.f32 %v458, %v337
        %461 = vrot.lane.b32.xlu0 %v459, 96
        %v462 = vpop.permute.xlu0 %461
        %v463 = vrot.slane %v462, 1
        %v464 = vsel %vm443, %v462, %v463
        %v466 = vadd.f32 %v395, %v464
        %s467 = sld [smem:[#allocation7 + $0x11]]
        %v468 = vstv %s467
        %v469 = vmul.f32 %v468, %v337
        %471 = vrot.lane.b32.xlu0 %v469, 96
        %v472 = vpop.permute.xlu0 %471
        %v473 = vrot.slane %v472, 1
        %v474 = vsel %vm443, %v472, %v473
        %v476 = vadd.f32 %v405, %v474
        %s477 = sld [smem:[#allocation7 + $0x12]]
        %v478 = vstv %s477
        %v479 = vmul.f32 %v478, %v337
        %481 = vrot.lane.b32.xlu0 %v479, 96
        %v482 = vpop.permute.xlu0 %481
        %v483 = vrot.slane %v482, 1
        %v484 = vsel %vm443, %v482, %v483
        %v486 = vadd.f32 %v415, %v484
        %s487 = sld [smem:[#allocation7 + $0x13]]
        %v488 = vstv %s487
        %v489 = vmul.f32 %v488, %v337
        %491 = vrot.lane.b32.xlu0 %v489, 96
        %v492 = vpop.permute.xlu0 %491
        %v493 = vrot.slane %v492, 1
        %v494 = vsel %vm443, %v492, %v493
        %v496 = vadd.f32 %v425, %v494
        %s497 = sld [smem:[#allocation7 + $0x14]]
        %v498 = vstv %s497
        %v499 = vmul.f32 %v498, %v337
        %501 = vrot.lane.b32.xlu0 %v499, 96
        %v502 = vpop.permute.xlu0 %501
        %v503 = vrot.slane %v502, 1
        %v504 = vsel %vm443, %v502, %v503
        %v506 = vadd.f32 %v435, %v504
        %s507 = sld [smem:[#allocation7 + $0x15]]
        %v508 = vstv %s507
        %v509 = vmul.f32 %v508, %v337
        %511 = vrot.lane.b32.xlu0 %v509, 80
        %v512 = vpop.permute.xlu0 %511
        %v513 = vrot.slane %v512, 1
        %vm514 = vcmask 654336
        %v515 = vsel %vm514, %v512, %v513
        %v517 = vadd.f32 %v446, %v515
        %s518 = sld [smem:[#allocation7 + $0x16]]
        %v519 = vstv %s518
        %v520 = vmul.f32 %v519, %v337
        %522 = vrot.lane.b32.xlu0 %v520, 80
        %v523 = vpop.permute.xlu0 %522
        %v524 = vrot.slane %v523, 1
        %v525 = vsel %vm514, %v523, %v524
        %v527 = vadd.f32 %v456, %v525
        %s528 = sld [smem:[#allocation7 + $0x17]]
        %v529 = vstv %s528
        %v530 = vmul.f32 %v529, %v337
        %532 = vrot.lane.b32.xlu0 %v530, 80
        %v533 = vpop.permute.xlu0 %532
        %v534 = vrot.slane %v533, 1
        %v535 = vsel %vm514, %v533, %v534
        %v537 = vadd.f32 %v466, %v535
        %s538 = sld [smem:[#allocation7 + $0x18]]
        %v539 = vld [vmem:[%s314] ss:$2 sm:$0x3]
        %v540 = vstv %s538
        %v541 = vmul.f32 %v540, %v539
        %543 = vrot.lane.b32.xlu0 %v541, 80
        %v544 = vpop.permute.xlu0 %543
        %v545 = vrot.slane %v544, 7
        %v546 = vsel %vm514, %v545, %v544
        %v548 = vadd.f32 %v476, %v546
        %s549 = sld [smem:[#allocation7 + $0x19]]
        %v550 = vld [vmem:[%s314] ss:$2 sm:$0x7]
        %v551 = vstv %s549
        %v552 = vmul.f32 %v551, %v550
        %554 = vrot.lane.b32.xlu0 %v552, 80
        %v555 = vpop.permute.xlu0 %554
        %v556 = vrot.slane %v555, 7
        %v557 = vsel %vm514, %v556, %v555
        %v559 = vadd.f32 %v486, %v557
        %s560 = sld [smem:[#allocation7 + $0x1a]]
        %v561 = vstv %s560
        %v562 = vmul.f32 %v561, %v550
        %564 = vrot.lane.b32.xlu0 %v562, 80
        %v565 = vpop.permute.xlu0 %564
        %v566 = vrot.slane %v565, 7
        %v567 = vsel %vm514, %v566, %v565
        %v569 = vadd.f32 %v496, %v567
        %s570 = sld [smem:[#allocation7 + $0x1b]]
        %v571 = vstv %s570
        %v572 = vmul.f32 %v571, %v550
        %574 = vrot.lane.b32.xlu0 %v572, 80
        %v575 = vpop.permute.xlu0 %574
        %v576 = vrot.slane %v575, 7
        %v577 = vsel %vm514, %v576, %v575
        %v579 = vadd.f32 %v506, %v577
        %s580 = sld [smem:[#allocation7 + $0x1c]]
        %v581 = vstv %s580
        %v582 = vmul.f32 %v581, %v550
        %584 = vrot.lane.b32.xlu0 %v582, 64
        %v585 = vpop.permute.xlu0 %584
        %v586 = vrot.slane %v585, 7
        %vm587 = vcmask 523264
        %v588 = vsel %vm587, %v586, %v585
        %v590 = vadd.f32 %v517, %v588
        %s591 = sld [smem:[#allocation7 + $0x1d]]
        %v592 = vstv %s591
        %v593 = vmul.f32 %v592, %v550
        %595 = vrot.lane.b32.xlu0 %v593, 64
        %v596 = vpop.permute.xlu0 %595
        %v597 = vrot.slane %v596, 7
        %v598 = vsel %vm587, %v597, %v596
        %v600 = vadd.f32 %v527, %v598
        %s601 = sld [smem:[#allocation7 + $0x1e]]
        %v602 = vstv %s601
        %v603 = vmul.f32 %v602, %v550
        %605 = vrot.lane.b32.xlu0 %v603, 64
        %v606 = vpop.permute.xlu0 %605
        %v607 = vrot.slane %v606, 7
        %v608 = vsel %vm587, %v607, %v606
        %v610 = vadd.f32 %v537, %v608
        %s611 = sld [smem:[#allocation7 + $0x1f]]
        %v612 = vstv %s611
        %v613 = vmul.f32 %v612, %v550
        %615 = vrot.lane.b32.xlu0 %v613, 64
        %v616 = vpop.permute.xlu0 %615
        %v617 = vrot.slane %v616, 7
        %v618 = vsel %vm587, %v617, %v616
        %v620 = vadd.f32 %v548, %v618
        %s621 = sld [smem:[#allocation7 + $0x20]]
        %v622 = vstv %s621
        %v623 = vmul.f32 %v622, %v550
        %625 = vrot.lane.b32.xlu0 %v623, 64
        %v626 = vpop.permute.xlu0 %625
        %v627 = vrot.slane %v626, 7
        %v628 = vsel %vm587, %v627, %v626
        %v630 = vadd.f32 %v559, %v628
        %s631 = sld [smem:[#allocation7 + $0x21]]
        %v632 = vstv %s631
        %v633 = vmul.f32 %v632, %v550
        %635 = vrot.lane.b32.xlu0 %v633, 64
        %v636 = vpop.permute.xlu0 %635
        %v637 = vrot.slane %v636, 7
        %v638 = vsel %vm587, %v637, %v636
        %v640 = vadd.f32 %v569, %v638
        %s641 = sld [smem:[#allocation7 + $0x22]]
        %v642 = vstv %s641
        %v643 = vmul.f32 %v642, %v550
        %645 = vrot.lane.b32.xlu0 %v643, 64
        %v646 = vpop.permute.xlu0 %645
        %v647 = vrot.slane %v646, 7
        %v648 = vsel %vm587, %v647, %v646
        %v650 = vadd.f32 %v579, %v648
        %s651 = sld [smem:[#allocation7 + $0x23]]
        %v652 = vstv %s651
        %v653 = vmul.f32 %v652, %v550
        %655 = vrot.lane.b32.xlu0 %v653, 48
        %v656 = vpop.permute.xlu0 %655
        %v657 = vrot.slane %v656, 7
        %vm658 = vcmask 392192
        %v659 = vsel %vm658, %v657, %v656
        %v661 = vadd.f32 %v590, %v659
        %s662 = sld [smem:[#allocation7 + $0x24]]
        %v663 = vstv %s662
        %v664 = vmul.f32 %v663, %v550
        %666 = vrot.lane.b32.xlu0 %v664, 48
        %v667 = vpop.permute.xlu0 %666
        %v668 = vrot.slane %v667, 7
        %v669 = vsel %vm658, %v668, %v667
        %v671 = vadd.f32 %v600, %v669
        %s672 = sld [smem:[#allocation7 + $0x25]]
        %v673 = vstv %s672
        %v674 = vmul.f32 %v673, %v550
        %676 = vrot.lane.b32.xlu0 %v674, 48
        %v677 = vpop.permute.xlu0 %676
        %v678 = vrot.slane %v677, 7
        %v679 = vsel %vm658, %v678, %v677
        %v681 = vadd.f32 %v610, %v679
        %s682 = sld [smem:[#allocation7 + $0x26]]
        %v683 = vstv %s682
        %v684 = vmul.f32 %v683, %v550
        %686 = vrot.lane.b32.xlu0 %v684, 48
        %v687 = vpop.permute.xlu0 %686
        %v688 = vrot.slane %v687, 7
        %v689 = vsel %vm658, %v688, %v687
        %v691 = vadd.f32 %v620, %v689
        %s692 = sld [smem:[#allocation7 + $0x27]]
        %v693 = vstv %s692
        %v694 = vmul.f32 %v693, %v550
        %696 = vrot.lane.b32.xlu0 %v694, 48
        %v697 = vpop.permute.xlu0 %696
        %v698 = vrot.slane %v697, 7
        %v699 = vsel %vm658, %v698, %v697
        %v701 = vadd.f32 %v630, %v699
        %s702 = sld [smem:[#allocation7 + $0x28]]
        %v703 = vstv %s702
        %v704 = vmul.f32 %v703, %v550
        %706 = vrot.lane.b32.xlu0 %v704, 48
        %v707 = vpop.permute.xlu0 %706
        %v708 = vrot.slane %v707, 7
        %v709 = vsel %vm658, %v708, %v707
        %v711 = vadd.f32 %v640, %v709
        %s712 = sld [smem:[#allocation7 + $0x29]]
        %v713 = vstv %s712
        %v714 = vmul.f32 %v713, %v550
        %716 = vrot.lane.b32.xlu0 %v714, 48
        %v717 = vpop.permute.xlu0 %716
        %v718 = vrot.slane %v717, 7
        %v719 = vsel %vm658, %v718, %v717
        %v721 = vadd.f32 %v650, %v719
        %s722 = sld [smem:[#allocation7 + $0x2a]]
        %v723 = vstv %s722
        %v724 = vmul.f32 %v723, %v550
        %726 = vrot.lane.b32.xlu0 %v724, 32
        %v727 = vpop.permute.xlu0 %726
        %v728 = vrot.slane %v727, 7
        %vm729 = vcmask 261120
        %v730 = vsel %vm729, %v728, %v727
        %v732 = vadd.f32 %v661, %v730
        %s733 = sld [smem:[#allocation7 + $0x2b]]
        %v734 = vstv %s733
        %v735 = vmul.f32 %v734, %v550
        %737 = vrot.lane.b32.xlu0 %v735, 32
        %v738 = vpop.permute.xlu0 %737
        %v739 = vrot.slane %v738, 7
        %v740 = vsel %vm729, %v739, %v738
        %v742 = vadd.f32 %v671, %v740
        %s743 = sld [smem:[#allocation7 + $0x2c]]
        %v744 = vstv %s743
        %v745 = vmul.f32 %v744, %v550
        %747 = vrot.lane.b32.xlu0 %v745, 32
        %v748 = vpop.permute.xlu0 %747
        %v749 = vrot.slane %v748, 7
        %v750 = vsel %vm729, %v749, %v748
        %v752 = vadd.f32 %v681, %v750
        %s753 = sld [smem:[#allocation7 + $0x2d]]
        %v754 = vstv %s753
        %v755 = vmul.f32 %v754, %v550
        %757 = vrot.lane.b32.xlu0 %v755, 32
        %v758 = vpop.permute.xlu0 %757
        %v759 = vrot.slane %v758, 7
        %v760 = vsel %vm729, %v759, %v758
        %v762 = vadd.f32 %v691, %v760
        %s763 = sld [smem:[#allocation7 + $0x2e]]
        %v764 = vstv %s763
        %v765 = vmul.f32 %v764, %v550
        %767 = vrot.lane.b32.xlu0 %v765, 32
        %v768 = vpop.permute.xlu0 %767
        %v769 = vrot.slane %v768, 7
        %v770 = vsel %vm729, %v769, %v768
        %v772 = vadd.f32 %v701, %v770
        %s773 = sld [smem:[#allocation7 + $0x2f]]
        %v774 = vstv %s773
        %v775 = vmul.f32 %v774, %v550
        %777 = vrot.lane.b32.xlu0 %v775, 32
        %v778 = vpop.permute.xlu0 %777
        %v779 = vrot.slane %v778, 7
        %v780 = vsel %vm729, %v779, %v778
        %v782 = vadd.f32 %v711, %v780
        %s783 = sld [smem:[#allocation7 + $0x30]]
        %v784 = vstv %s783
        %v785 = vmul.f32 %v784, %v550
        %787 = vrot.lane.b32.xlu0 %v785, 32
        %v788 = vpop.permute.xlu0 %787
        %v789 = vrot.slane %v788, 7
        %v790 = vsel %vm729, %v789, %v788
        %v792 = vadd.f32 %v721, %v790
        %s793 = sld [smem:[#allocation7 + $0x31]]
        %s794 = scalar_lea.vmem [#allocation2], 1
        %v795 = vld [vmem:[%s794] ss:$2 sm:$0x7]
        %v796 = vstv %s793
        %v797 = vmul.f32 %v796, %v795
        %v798 = vadd.f32 %v732, %v797
        %s799 = sld [smem:[#allocation7 + $0x32]]
        %v800 = vstv %s799
        %v801 = vmul.f32 %v800, %v795
        %v802 = vadd.f32 %v742, %v801
        %s803 = sld [smem:[#allocation7 + $0x33]]
        %v804 = vstv %s803
        %v805 = vmul.f32 %v804, %v795
        %v806 = vadd.f32 %v752, %v805
        %s807 = sld [smem:[#allocation7 + $0x34]]
        %v808 = vstv %s807
        %v809 = vmul.f32 %v808, %v795
        %v810 = vadd.f32 %v762, %v809
        %s811 = sld [smem:[#allocation7 + $0x35]]
        %v812 = vstv %s811
        %v813 = vmul.f32 %v812, %v795
        %v814 = vadd.f32 %v772, %v813
        %s815 = sld [smem:[#allocation7 + $0x36]]
        %v816 = vstv %s815
        %v817 = vmul.f32 %v816, %v795
        %v818 = vadd.f32 %v782, %v817
        %s819 = sld [smem:[#allocation7 + $0x37]]
        %v820 = vstv %s819
        %v821 = vmul.f32 %v820, %v795
        %v822 = vadd.f32 %v792, %v821
        %s823 = sld [smem:[#allocation7 + $0x38]]
        %v824 = vstv %s823
        %v825 = vmul.f32 %v824, %v795
        %827 = vrot.lane.b32.xlu0 %v825, 112
        %v828 = vpop.permute.xlu0 %827
        %v829 = vrot.slane %v828, 1
        %v830 = vsel %vm372, %v828, %v829
        %v832 = vadd.f32 %v798, %v830
        %s833 = sld [smem:[#allocation7 + $0x39]]
        %v834 = vstv %s833
        %v835 = vmul.f32 %v834, %v795
        %837 = vrot.lane.b32.xlu0 %v835, 112
        %v838 = vpop.permute.xlu0 %837
        %v839 = vrot.slane %v838, 1
        %v840 = vsel %vm372, %v838, %v839
        %v842 = vadd.f32 %v802, %v840
        %s843 = sld [smem:[#allocation7 + $0x3a]]
        %v844 = vstv %s843
        %v845 = vmul.f32 %v844, %v795
        %847 = vrot.lane.b32.xlu0 %v845, 112
        %v848 = vpop.permute.xlu0 %847
        %v849 = vrot.slane %v848, 1
        %v850 = vsel %vm372, %v848, %v849
        %v852 = vadd.f32 %v806, %v850
        %s853 = sld [smem:[#allocation7 + $0x3b]]
        %v854 = vstv %s853
        %v855 = vmul.f32 %v854, %v795
        %857 = vrot.lane.b32.xlu0 %v855, 112
        %v858 = vpop.permute.xlu0 %857
        %v859 = vrot.slane %v858, 1
        %v860 = vsel %vm372, %v858, %v859
        %v862 = vadd.f32 %v810, %v860
        %s863 = sld [smem:[#allocation7 + $0x3c]]
        %v864 = vstv %s863
        %v865 = vmul.f32 %v864, %v795
        %867 = vrot.lane.b32.xlu0 %v865, 112
        %v868 = vpop.permute.xlu0 %867
        %v869 = vrot.slane %v868, 1
        %v870 = vsel %vm372, %v868, %v869
        %v872 = vadd.f32 %v814, %v870
        %s873 = sld [smem:[#allocation7 + $0x3d]]
        %v874 = vstv %s873
        %v875 = vmul.f32 %v874, %v795
        %877 = vrot.lane.b32.xlu0 %v875, 112
        %v878 = vpop.permute.xlu0 %877
        %v879 = vrot.slane %v878, 1
        %v880 = vsel %vm372, %v878, %v879
        %v882 = vadd.f32 %v818, %v880
        %s883 = sld [smem:[#allocation7 + $0x3e]]
        %v884 = vstv %s883
        %v885 = vmul.f32 %v884, %v795
        %887 = vrot.lane.b32.xlu0 %v885, 112
        %v888 = vpop.permute.xlu0 %887
        %v889 = vrot.slane %v888, 1
        %v890 = vsel %vm372, %v888, %v889
        %v892 = vadd.f32 %v822, %v890
        %s893 = sld [smem:[#allocation7 + $0x3f]]
        %v894 = vstv %s893
        %v895 = vmul.f32 %v894, %v795
        %897 = vrot.lane.b32.xlu0 %v895, 96
        %v898 = vpop.permute.xlu0 %897
        %v899 = vrot.slane %v898, 1
        %v900 = vsel %vm443, %v898, %v899
        %v902 = vadd.f32 %v832, %v900
        %s903 = sld [smem:[#allocation7 + $0x40]]
        %v904 = vstv %s903
        %v905 = vmul.f32 %v904, %v795
        %907 = vrot.lane.b32.xlu0 %v905, 96
        %v908 = vpop.permute.xlu0 %907
        %v909 = vrot.slane %v908, 1
        %v910 = vsel %vm443, %v908, %v909
        %v912 = vadd.f32 %v842, %v910
        %s913 = sld [smem:[#allocation7 + $0x41]]
        %v914 = vstv %s913
        %v915 = vmul.f32 %v914, %v795
        %917 = vrot.lane.b32.xlu0 %v915, 96
        %v918 = vpop.permute.xlu0 %917
        %v919 = vrot.slane %v918, 1
        %v920 = vsel %vm443, %v918, %v919
        %v922 = vadd.f32 %v852, %v920
        %s923 = sld [smem:[#allocation7 + $0x42]]
        %v924 = vstv %s923
        %v925 = vmul.f32 %v924, %v795
        %927 = vrot.lane.b32.xlu0 %v925, 96
        %v928 = vpop.permute.xlu0 %927
        %v929 = vrot.slane %v928, 1
        %v930 = vsel %vm443, %v928, %v929
        %v932 = vadd.f32 %v862, %v930
        %s933 = sld [smem:[#allocation7 + $0x43]]
        %v934 = vstv %s933
        %v935 = vmul.f32 %v934, %v795
        %937 = vrot.lane.b32.xlu0 %v935, 96
        %v938 = vpop.permute.xlu0 %937
        %v939 = vrot.slane %v938, 1
        %v940 = vsel %vm443, %v938, %v939
        %v942 = vadd.f32 %v872, %v940
        %s943 = sld [smem:[#allocation7 + $0x44]]
        %v944 = vstv %s943
        %v945 = vmul.f32 %v944, %v795
        %947 = vrot.lane.b32.xlu0 %v945, 96
        %v948 = vpop.permute.xlu0 %947
        %v949 = vrot.slane %v948, 1
        %v950 = vsel %vm443, %v948, %v949
        %v952 = vadd.f32 %v882, %v950
        %s953 = sld [smem:[#allocation7 + $0x45]]
        %v954 = vstv %s953
        %v955 = vmul.f32 %v954, %v795
        %957 = vrot.lane.b32.xlu0 %v955, 96
        %v958 = vpop.permute.xlu0 %957
        %v959 = vrot.slane %v958, 1
        %v960 = vsel %vm443, %v958, %v959
        %v962 = vadd.f32 %v892, %v960
        %s963 = sld [smem:[#allocation7 + $0x46]]
        %v964 = vstv %s963
        %v965 = vmul.f32 %v964, %v795
        %967 = vrot.lane.b32.xlu0 %v965, 80
        %v968 = vpop.permute.xlu0 %967
        %v969 = vrot.slane %v968, 1
        %v970 = vsel %vm514, %v968, %v969
        %v972 = vadd.f32 %v902, %v970
        %s973 = sld [smem:[#allocation7 + $0x47]]
        %v974 = vstv %s973
        %v975 = vmul.f32 %v974, %v795
        %977 = vrot.lane.b32.xlu0 %v975, 80
        %v978 = vpop.permute.xlu0 %977
        %v979 = vrot.slane %v978, 1
        %v980 = vsel %vm514, %v978, %v979
        %v982 = vadd.f32 %v912, %v980
        %s983 = sld [smem:[#allocation7 + $0x48]]
        %v984 = vstv %s983
        %v985 = vmul.f32 %v984, %v795
        %987 = vrot.lane.b32.xlu0 %v985, 80
        %v988 = vpop.permute.xlu0 %987
        %v989 = vrot.slane %v988, 1
        %v990 = vsel %vm514, %v988, %v989
        %v992 = vadd.f32 %v922, %v990
        %s993 = sld [smem:[#allocation7 + $0x49]]
        %v994 = vld [vmem:[%s334] ss:$2 sm:$0x3]
        %v995 = vstv %s993
        %v996 = vmul.f32 %v995, %v994
        %998 = vrot.lane.b32.xlu0 %v996, 80
        %v999 = vpop.permute.xlu0 %998
        %v1000 = vrot.slane %v999, 7
        %v1001 = vsel %vm514, %v1000, %v999
        %v1003 = vadd.f32 %v932, %v1001
        %s1004 = sld [smem:[#allocation7 + $0x4a]]
        %v1005 = vld [vmem:[%s334] ss:$2 sm:$0x7]
        %v1006 = vstv %s1004
        %v1007 = vmul.f32 %v1006, %v1005
        %1009 = vrot.lane.b32.xlu0 %v1007, 80
        %v1010 = vpop.permute.xlu0 %1009
        %v1011 = vrot.slane %v1010, 7
        %v1012 = vsel %vm514, %v1011, %v1010
        %v1014 = vadd.f32 %v942, %v1012
        %s1015 = sld [smem:[#allocation7 + $0x4b]]
        %v1016 = vstv %s1015
        %v1017 = vmul.f32 %v1016, %v1005
        %1019 = vrot.lane.b32.xlu0 %v1017, 80
        %v1020 = vpop.permute.xlu0 %1019
        %v1021 = vrot.slane %v1020, 7
        %v1022 = vsel %vm514, %v1021, %v1020
        %v1024 = vadd.f32 %v952, %v1022
        %s1025 = sld [smem:[#allocation7 + $0x4c]]
        %v1026 = vstv %s1025
        %v1027 = vmul.f32 %v1026, %v1005
        %1029 = vrot.lane.b32.xlu0 %v1027, 80
        %v1030 = vpop.permute.xlu0 %1029
        %v1031 = vrot.slane %v1030, 7
        %v1032 = vsel %vm514, %v1031, %v1030
        %v1034 = vadd.f32 %v962, %v1032
        %s1035 = sld [smem:[#allocation7 + $0x4d]]
        %v1036 = vstv %s1035
        %v1037 = vmul.f32 %v1036, %v1005
        %1039 = vrot.lane.b32.xlu0 %v1037, 64
        %v1040 = vpop.permute.xlu0 %1039
        %v1041 = vrot.slane %v1040, 7
        %v1042 = vsel %vm587, %v1041, %v1040
        %v1044 = vadd.f32 %v972, %v1042
        %s1045 = sld [smem:[#allocation7 + $0x4e]]
        %v1046 = vstv %s1045
        %v1047 = vmul.f32 %v1046, %v1005
        %1049 = vrot.lane.b32.xlu0 %v1047, 64
        %v1050 = vpop.permute.xlu0 %1049
        %v1051 = vrot.slane %v1050, 7
        %v1052 = vsel %vm587, %v1051, %v1050
        %v1054 = vadd.f32 %v982, %v1052
        %s1055 = sld [smem:[#allocation7 + $0x4f]]
        %v1056 = vstv %s1055
        %v1057 = vmul.f32 %v1056, %v1005
        %1059 = vrot.lane.b32.xlu0 %v1057, 64
        %v1060 = vpop.permute.xlu0 %1059
        %v1061 = vrot.slane %v1060, 7
        %v1062 = vsel %vm587, %v1061, %v1060
        %v1064 = vadd.f32 %v992, %v1062
        %s1065 = sld [smem:[#allocation7 + $0x50]]
        %v1066 = vstv %s1065
        %v1067 = vmul.f32 %v1066, %v1005
        %1069 = vrot.lane.b32.xlu0 %v1067, 64
        %v1070 = vpop.permute.xlu0 %1069
        %v1071 = vrot.slane %v1070, 7
        %v1072 = vsel %vm587, %v1071, %v1070
        %v1074 = vadd.f32 %v1003, %v1072
        %s1075 = sld [smem:[#allocation7 + $0x51]]
        %v1076 = vstv %s1075
        %v1077 = vmul.f32 %v1076, %v1005
        %1079 = vrot.lane.b32.xlu0 %v1077, 64
        %v1080 = vpop.permute.xlu0 %1079
        %v1081 = vrot.slane %v1080, 7
        %v1082 = vsel %vm587, %v1081, %v1080
        %v1084 = vadd.f32 %v1014, %v1082
        %s1085 = sld [smem:[#allocation7 + $0x52]]
        %v1086 = vstv %s1085
        %v1087 = vmul.f32 %v1086, %v1005
        %1089 = vrot.lane.b32.xlu0 %v1087, 64
        %v1090 = vpop.permute.xlu0 %1089
        %v1091 = vrot.slane %v1090, 7
        %v1092 = vsel %vm587, %v1091, %v1090
        %v1094 = vadd.f32 %v1024, %v1092
        %s1095 = sld [smem:[#allocation7 + $0x53]]
        %v1096 = vstv %s1095
        %v1097 = vmul.f32 %v1096, %v1005
        %1099 = vrot.lane.b32.xlu0 %v1097, 64
        %v1100 = vpop.permute.xlu0 %1099
        %v1101 = vrot.slane %v1100, 7
        %v1102 = vsel %vm587, %v1101, %v1100
        %v1104 = vadd.f32 %v1034, %v1102
        %s1105 = sld [smem:[#allocation7 + $0x54]]
        %v1106 = vstv %s1105
        %v1107 = vmul.f32 %v1106, %v1005
        %1109 = vrot.lane.b32.xlu0 %v1107, 48
        %v1110 = vpop.permute.xlu0 %1109
        %v1111 = vrot.slane %v1110, 7
        %v1112 = vsel %vm658, %v1111, %v1110
        %v1114 = vadd.f32 %v1044, %v1112
        %s1115 = sld [smem:[#allocation7 + $0x55]]
        %v1116 = vstv %s1115
        %v1117 = vmul.f32 %v1116, %v1005
        %1119 = vrot.lane.b32.xlu0 %v1117, 48
        %v1120 = vpop.permute.xlu0 %1119
        %v1121 = vrot.slane %v1120, 7
        %v1122 = vsel %vm658, %v1121, %v1120
        %v1124 = vadd.f32 %v1054, %v1122
        %s1125 = sld [smem:[#allocation7 + $0x56]]
        %v1126 = vstv %s1125
        %v1127 = vmul.f32 %v1126, %v1005
        %1129 = vrot.lane.b32.xlu0 %v1127, 48
        %v1130 = vpop.permute.xlu0 %1129
        %v1131 = vrot.slane %v1130, 7
        %v1132 = vsel %vm658, %v1131, %v1130
        %v1134 = vadd.f32 %v1064, %v1132
        %s1135 = sld [smem:[#allocation7 + $0x57]]
        %v1136 = vstv %s1135
        %v1137 = vmul.f32 %v1136, %v1005
        %1139 = vrot.lane.b32.xlu0 %v1137, 48
        %v1140 = vpop.permute.xlu0 %1139
        %v1141 = vrot.slane %v1140, 7
        %v1142 = vsel %vm658, %v1141, %v1140
        %v1144 = vadd.f32 %v1074, %v1142
        %s1145 = sld [smem:[#allocation7 + $0x58]]
        %v1146 = vstv %s1145
        %v1147 = vmul.f32 %v1146, %v1005
        %1149 = vrot.lane.b32.xlu0 %v1147, 48
        %v1150 = vpop.permute.xlu0 %1149
        %v1151 = vrot.slane %v1150, 7
        %v1152 = vsel %vm658, %v1151, %v1150
        %v1154 = vadd.f32 %v1084, %v1152
        %s1155 = sld [smem:[#allocation7 + $0x59]]
        %v1156 = vstv %s1155
        %v1157 = vmul.f32 %v1156, %v1005
        %1159 = vrot.lane.b32.xlu0 %v1157, 48
        %v1160 = vpop.permute.xlu0 %1159
        %v1161 = vrot.slane %v1160, 7
        %v1162 = vsel %vm658, %v1161, %v1160
        %v1164 = vadd.f32 %v1094, %v1162
        %s1165 = sld [smem:[#allocation7 + $0x5a]]
        %v1166 = vstv %s1165
        %v1167 = vmul.f32 %v1166, %v1005
        %1169 = vrot.lane.b32.xlu0 %v1167, 48
        %v1170 = vpop.permute.xlu0 %1169
        %v1171 = vrot.slane %v1170, 7
        %v1172 = vsel %vm658, %v1171, %v1170
        %v1174 = vadd.f32 %v1104, %v1172
        %s1175 = sld [smem:[#allocation7 + $0x5b]]
        %v1176 = vstv %s1175
        %v1177 = vmul.f32 %v1176, %v1005
        %1179 = vrot.lane.b32.xlu0 %v1177, 32
        %v1180 = vpop.permute.xlu0 %1179
        %v1181 = vrot.slane %v1180, 7
        %v1182 = vsel %vm729, %v1181, %v1180
        %v1184 = vadd.f32 %v1114, %v1182
        %s1185 = sld [smem:[#allocation7 + $0x5c]]
        %v1186 = vstv %s1185
        %v1187 = vmul.f32 %v1186, %v1005
        %1189 = vrot.lane.b32.xlu0 %v1187, 32
        %v1190 = vpop.permute.xlu0 %1189
        %v1191 = vrot.slane %v1190, 7
        %v1192 = vsel %vm729, %v1191, %v1190
        %v1194 = vadd.f32 %v1124, %v1192
        %s1195 = sld [smem:[#allocation7 + $0x5d]]
        %v1196 = vstv %s1195
        %v1197 = vmul.f32 %v1196, %v1005
        %1199 = vrot.lane.b32.xlu0 %v1197, 32
        %v1200 = vpop.permute.xlu0 %1199
        %v1201 = vrot.slane %v1200, 7
        %v1202 = vsel %vm729, %v1201, %v1200
        %v1204 = vadd.f32 %v1134, %v1202
        %s1205 = sld [smem:[#allocation7 + $0x5e]]
        %v1206 = vstv %s1205
        %v1207 = vmul.f32 %v1206, %v1005
        %1209 = vrot.lane.b32.xlu0 %v1207, 32
        %v1210 = vpop.permute.xlu0 %1209
        %v1211 = vrot.slane %v1210, 7
        %v1212 = vsel %vm729, %v1211, %v1210
        %v1214 = vadd.f32 %v1144, %v1212
        %s1215 = sld [smem:[#allocation7 + $0x5f]]
        %v1216 = vstv %s1215
        %v1217 = vmul.f32 %v1216, %v1005
        %1219 = vrot.lane.b32.xlu0 %v1217, 32
        %v1220 = vpop.permute.xlu0 %1219
        %v1221 = vrot.slane %v1220, 7
        %v1222 = vsel %vm729, %v1221, %v1220
        %v1224 = vadd.f32 %v1154, %v1222
        %s1225 = sld [smem:[#allocation7 + $0x60]]
        %v1226 = vstv %s1225
        %v1227 = vmul.f32 %v1226, %v1005
        %1229 = vrot.lane.b32.xlu0 %v1227, 32
        %v1230 = vpop.permute.xlu0 %1229
        %v1231 = vrot.slane %v1230, 7
        %v1232 = vsel %vm729, %v1231, %v1230
        %v1234 = vadd.f32 %v1164, %v1232
        %s1235 = sld [smem:[#allocation7 + $0x61]]
        %v1236 = vstv %s1235
        %v1237 = vmul.f32 %v1236, %v1005
        %1239 = vrot.lane.b32.xlu0 %v1237, 32
        %v1240 = vpop.permute.xlu0 %1239
        %v1241 = vrot.slane %v1240, 7
        %v1242 = vsel %vm729, %v1241, %v1240
        %v1244 = vadd.f32 %v1174, %v1242
        %v1245 = vld [vmem:[#allocation10] ss:$8 sm:$0x3]
        %1247 = vrot.lane.b32.xlu0 %v1245, 77
        %v1248 = vpop.permute.xlu0 %1247
        %v1249 = vrot.slane %v1248, 7
        %vm1250 = vcmask 629760
        %v1251 = vsel %vm1250, %v1249, %v1248
        %v1253 = vmul.f32 %v1184, %v1251
        %s1254 = scalar_lea.vmem [#allocation10], 1
        %v1255 = vld [vmem:[%s1254] ss:$8 sm:$0x3]
        %1257 = vrot.lane.b32.xlu0 %v1255, 78
        %v1258 = vpop.permute.xlu0 %1257
        %v1259 = vrot.slane %v1258, 7
        %vm1260 = vcmask 637952
        %v1261 = vsel %vm1260, %v1259, %v1258
        %v1263 = vmul.f32 %v1194, %v1261
        %1265 = vrot.lane.b32.xlu0 %v1263, 127
        %v1266 = vpop.permute.xlu0 %1265
        %v1267 = vrot.slane %v1266, 1
        %vm1268 = vcmask 1039360
        %v1269 = vsel %vm1268, %v1266, %v1267
        %v1271 = vadd.f32 %v1253, %v1269
        %s1272 = scalar_lea.vmem [#allocation10], 2
        %v1273 = vld [vmem:[%s1272] ss:$8 sm:$0x3]
        %1275 = vrot.lane.b32.xlu0 %v1273, 79
        %v1276 = vpop.permute.xlu0 %1275
        %v1277 = vrot.slane %v1276, 7
        %vm1278 = vcmask 646144
        %v1279 = vsel %vm1278, %v1277, %v1276
        %v1281 = vmul.f32 %v1204, %v1279
        %1283 = vrot.lane.b32.xlu0 %v1281, 126
        %v1284 = vpop.permute.xlu0 %1283
        %v1285 = vrot.slane %v1284, 1
        %vm1286 = vcmask 1031168
        %v1287 = vsel %vm1286, %v1284, %v1285
        %v1289 = vadd.f32 %v1271, %v1287
        %s1290 = scalar_lea.vmem [#allocation10], 3
        %v1291 = vld [vmem:[%s1290] ss:$8 sm:$0x3]
        %1293 = vrot.lane.b32.xlu0 %v1291, 80
        %v1294 = vpop.permute.xlu0 %1293
        %v1295 = vrot.slane %v1294, 7
        %v1296 = vsel %vm514, %v1295, %v1294
        %v1298 = vmul.f32 %v1214, %v1296
        %1300 = vrot.lane.b32.xlu0 %v1298, 125
        %v1301 = vpop.permute.xlu0 %1300
        %v1302 = vrot.slane %v1301, 1
        %vm1303 = vcmask 1022976
        %v1304 = vsel %vm1303, %v1301, %v1302
        %v1306 = vadd.f32 %v1289, %v1304
        %s1307 = scalar_lea.vmem [#allocation10], 4
        %v1308 = vld [vmem:[%s1307] ss:$8 sm:$0x3]
        %1310 = vrot.lane.b32.xlu0 %v1308, 81
        %v1311 = vpop.permute.xlu0 %1310
        %v1312 = vrot.slane %v1311, 7
        %vm1313 = vcmask 662528
        %v1314 = vsel %vm1313, %v1312, %v1311
        %v1316 = vmul.f32 %v1224, %v1314
        %1318 = vrot.lane.b32.xlu0 %v1316, 124
        %v1319 = vpop.permute.xlu0 %1318
        %v1320 = vrot.slane %v1319, 1
        %vm1321 = vcmask 1014784
        %v1322 = vsel %vm1321, %v1319, %v1320
        %v1324 = vadd.f32 %v1306, %v1322
        %s1325 = scalar_lea.vmem [#allocation10], 5
        %v1326 = vld [vmem:[%s1325] ss:$8 sm:$0x3]
        %1328 = vrot.lane.b32.xlu0 %v1326, 82
        %v1329 = vpop.permute.xlu0 %1328
        %v1330 = vrot.slane %v1329, 7
        %vm1331 = vcmask 670720
        %v1332 = vsel %vm1331, %v1330, %v1329
        %v1334 = vmul.f32 %v1234, %v1332
        %1336 = vrot.lane.b32.xlu0 %v1334, 123
        %v1337 = vpop.permute.xlu0 %1336
        %v1338 = vrot.slane %v1337, 1
        %vm1339 = vcmask 1006592
        %v1340 = vsel %vm1339, %v1337, %v1338
        %v1342 = vadd.f32 %v1324, %v1340
        %s1343 = scalar_lea.vmem [#allocation10], 6
        %v1344 = vld [vmem:[%s1343] ss:$8 sm:$0x3]
        %1346 = vrot.lane.b32.xlu0 %v1344, 83
        %v1347 = vpop.permute.xlu0 %1346
        %v1348 = vrot.slane %v1347, 7
        %vm1349 = vcmask 678912
        %v1350 = vsel %vm1349, %v1348, %v1347
        %v1352 = vmul.f32 %v1244, %v1350
        %1354 = vrot.lane.b32.xlu0 %v1352, 122
        %v1355 = vpop.permute.xlu0 %1354
        %v1356 = vrot.slane %v1355, 1
        %vm1357 = vcmask 998400
        %v1358 = vsel %vm1357, %v1355, %v1356
        %v1360 = vadd.f32 %v1342, %v1358
        %s1361 = sld [smem:[#allocation8]]
        %v1362 = vstv %s1361
        %v1363 = vmul.f32 %v1360, %v1362
        %s1364 = sld [smem:[#allocation8 + $0x1]]
        %v1365 = vstv %s1364
        %v1366 = vadd.f32 %v1363, %v1365
        %v1367 = vxor.u32 %v1366, 2147483648
        %v1368 = vmul.f32 %v1367, 1.442695
        %v1369 = vpow.pop %v1368
        %v1370 = vadd.f32 %v1369, 1.0
        %v1371 = vrcp.pop %v1370
        %v1372 = vmul.f32 1.0, %v1371
        %v1374 = vlaneseq
        %v1375 = vshrl.u32 %v1374, 7
        %v1376 = vsub.s32 0, %v1375
        %v1377 = vrot.slane %v1372, %v1376
        %v1378 = vlaneseq
        %v1379 = vshrl.u32 %v1378, 7
        %v1380 = vsub.s32 1, %v1379
        %v1381 = vrot.slane %v1372, %v1380
        %v1382 = vlaneseq
        %v1383 = vshrl.u32 %v1382, 7
        %v1384 = vsub.s32 2, %v1383
        %v1385 = vrot.slane %v1372, %v1384
        %v1386 = vcombine.low %v1377, %v1381
        %1387 = vrot.lane.b32.xlu0 %v1386, 51
        %v1388 = vpop.permute.xlu0 %1387
        %1389 = vrot.lane.b32.xlu0 %v1385, 51
        %v1390 = vpop.permute.xlu0 %1389
        %v1391 = vrot.slane %v1388, 4
        %v1392 = vrot.slane %v1390, 4
        %v1393 = vsel %vm258, %v1391, %v1392
        %vm1394 = vcmask 416768
        %v1395 = vsel %vm1394, %v1388, %v1393
        %v1397 = vmul.f32 %v254, %v1395
        %1398 = vst [vmem:[%s253] sm:$0xff] %v1397
        %s1399 = sand.u32 %s121, 1
        %s1400 = scalar_lea.sflag [#allocation5], %s1399
        %s1401 = sand.u32 %s121, 1
        %s1402 = smul.addr %s1401, 8
        %s1403 = scalar_lea.vmem [#allocation12], %s1402
        // Predicated region
        $region53: #{tpu_custom_call.1} parent=35 // pred_check
          %p1404 = pneg %p131
        $region54: #{tpu_custom_call.1} parent=35 // pred_check_branch
          %1406 = sbr.rel (%p1404) target = $region56
        $region55: #{tpu_custom_call.1} parent=35 // pred_region
          %s1408 = ssub.s32 128, 128
          %1409 = vsyncadd %s1400, %s1408
          %s1410 = smul.addr %s24, 2
          %s1411 = smul.addr %s1410, 64
          %s1412 = scalar_lea.hbm %s4, %s1411
          %s1414 = sshll.u32 %s1403, 4
          %s1415 = int_to_ptr.vmem [resolvable:$true] %s1414
          %1417 = dma.vmem_to_hbm [thread:$0]  %s1415, 128, %s1412, %s1400
        $region56: #{tpu_custom_call.1} parent=35 // pred_fallthru
          _
      $region36: #{tpu_custom_call.1} parent=5 // pred_fallthru
        _
      %p1418 = scmp.le.s32.totalorder 2, %s19
      // Predicated region
      $region57: #{tpu_custom_call.1} parent=5 // pred_check
        %p1419 = pneg %p1418
      $region58: #{tpu_custom_call.1} parent=5 // pred_check_branch
        %1421 = sbr.rel (%p1419) target = $region60
      $region59: #{tpu_custom_call.1} parent=5 // pred_region
        %s1422 = ssub.s32 %s19, 2
        // Predicated region
        $region61: #{tpu_custom_call.1} parent=59 // pred_check
          %p1423 = pneg %p137
        $region62: #{tpu_custom_call.1} parent=59 // pred_check_branch
          %1425 = sbr.rel (%p1423) target = $region64
        $region63: #{tpu_custom_call.1} parent=59 // pred_region
          %s1426 = sand.u32 %s122, 1
          %s1427 = scalar_lea.sflag [#allocation5], %s1426
          %s1428 = sand.u32 %s122, 1
          %s1429 = smul.addr %s1428, 8
          %s1430 = scalar_lea.vmem [#allocation12], %s1429
          %1431 = dma.done %s1427, 128
        $region64: #{tpu_custom_call.1} parent=59 // pred_fallthru
          _
      $region60: #{tpu_custom_call.1} parent=5 // pred_fallthru
        _
    $region6: #{tpu_custom_call.1} parent=1 // loop_footer
      %s23 = sadd.s32 1, %s19
    $region7: #{tpu_custom_call.1} parent=1 // loop_footer_branch
      %18 = sbr.rel target = $region3
    $region8: #{tpu_custom_call.1} parent=1 // loop_exit
      _
    %1432 = vsyncpa [#allocation4], 1
    %s1433 = scalar_lea.sflag [#allocation4], 1
    %1434 = vsyncpa %s1433, 1
    %1435 = vsyncpa [#allocation11], 1
    %1436 = vsyncpa [#allocation5], 1
    %s1437 = scalar_lea.sflag [#allocation5], 1
    %1438 = vsyncpa %s1437, 1
    %1439 = vsyncpa [#allocation6], 1
    %s1440 = scalar_lea.sflag [#allocation6], 1
    %1441 = vsyncpa %s1440, 1
    %1442 = vsyncpa [#allocation9], 1

</llo_original>
